<compile_context>
chip_gen: v5e
topology: v5e:2x2
jax: 0.10.0
libtpu: 0.0.40
codegen_flags: <defaults>
</compile_context>

<pallas_src>
import functools

import numpy as np
import jax
import jax.numpy as jnp
from jax.experimental import pallas as pl
from jax.experimental.pallas import tpu as pltpu

BN_EPS = 1e-5
COUT = 8        # every conv layer has 8 output channels
POOL_C = 8      # AvgPool3d window over the channel dim
POOL_H = 11     # AvgPool3d window over H  -> model implies H == 11
N_HIDDEN = 15   # Linear(15, 1)            -> model implies W == 15


def _make_fused_kernel(batch, height, width, m_valid, m_pad):
    """Builds the fused forward kernel for static (batch, H, W)."""
    inv_m = 1.0 / m_valid
    inv_pool = 1.0 / (POOL_C * height)

    def kernel(x_ref, lane_ref, wconv_ref, bnp_ref, lb_ref, o_ref, patches_ref):
        # ---- per-lane constants / masks (derived in-kernel; no mask/sel DMAs)
        wvec = lane_ref[0:1, :]            # lin_w[x] on valid lanes, 0 elsewhere
        x_f = lane_ref[1:2, :]             # column index (f32, -1 on pad lanes)
        y_f = lane_ref[2:3, :]             # row index
        n_f = lane_ref[3:4, :]             # image index
        lane_idx = jax.lax.broadcasted_iota(jnp.int32, (1, m_pad), 1)
        valid = lane_idx < m_valid
        mx = {-1: x_f >= 1.0, 1: x_f <= float(width - 2)}    # x+dx in range
        my = {-1: y_f >= 1.0, 1: y_f <= float(height - 2)}   # y+dy in range

        def shifted(a, s):
            # b[:, m] = a[:, (m + s) % m_pad]  -- single XLU rotate, no relayout
            return pltpu.roll(a, (-s) % m_pad, axis=1)

        def for_each_tap(a, reflect, emit):
            """Builds the 9 conv taps of `a` (reflect or zero padding) one at a
            time (bounded vreg pressure) and hands each to emit(t, tap)."""
            zero = jnp.zeros_like(a)
            ap = shifted(a, 1)             # value at column x+1
            am = shifted(a, -1)            # value at column x-1
            cols = {
                -1: jnp.where(mx[-1], am, ap if reflect else zero),
                0: a,
                1: jnp.where(mx[1], ap, am if reflect else zero),
            }
            for dx in (-1, 0, 1):
                c = cols[dx]
                cu = shifted(c, -width)    # value at row y-1
                cd = shifted(c, width)     # value at row y+1
                taps_dy = {
                    -1: jnp.where(my[-1], cu, cd if reflect else zero),
                    0: c,
                    1: jnp.where(my[1], cd, cu if reflect else zero),
                }
                for dy in (-1, 0, 1):
                    emit((dy + 1) * 3 + (dx + 1), taps_dy[dy])

        def relu_bn(y, l):
            gamma = bnp_ref[l, 1]          # (COUT, 1)
            beta = bnp_ref[l, 2]
            r = jnp.where(valid, jnp.maximum(y, 0.0), 0.0)
            # One-pass BN statistics with folded scale (batch stats, train mode).
            mean = jnp.sum(r, axis=1, keepdims=True) * inv_m
            mean_sq = jnp.sum(r * r, axis=1, keepdims=True) * inv_m
            var = mean_sq - mean * mean
            scale = gamma * jax.lax.rsqrt(var + BN_EPS)
            out = scale * r + (beta - scale * mean)
            return jnp.where(valid, out, 0.0)   # keep padded lanes exactly zero

        # ---- layer 0: Cin = 1 -> 9 VPU FMAs (skip the MXU) ----
        x0 = x_ref[...]
        if m_pad > m_valid:                # 330 -> 384 tail handled in-kernel
            x0 = jnp.concatenate(
                [x0, jnp.zeros((1, m_pad - m_valid), jnp.float32)], axis=1)
        w0 = wconv_ref[0]                  # (COUT, 72); only cols 0..8 used
        acc = {"y": bnp_ref[0, 0]}         # bias, broadcasts on first add

        def emit_fma(t, tap):
            acc["y"] = acc["y"] + w0[:, t:t + 1] * tap

        for_each_tap(x0, True, emit_fma)
        a = relu_bn(acc["y"], 0)

        # ---- layers 1..3: stream taps into VMEM scratch, one MXU dot each ----
        def emit_store(t, tap):
            patches_ref[t * COUT:(t + 1) * COUT, :] = tap

        for l in (1, 2, 3):
            for_each_tap(a, l != 3, emit_store)   # layer 3 uses zero padding
            y = jnp.dot(wconv_ref[l], patches_ref[...],
                        preferred_element_type=jnp.float32) + bnp_ref[l, 0]
            a = relu_bn(y, l)

        # ---- AvgPool3d((8, 11, 1)) over (channel, H) + Linear(W -> 1) ----
        p = a * wvec                                   # fold lin_w into the pool
        colsum = jnp.sum(p, axis=0, keepdims=True)     # (1, m_pad)
        rows = []
        for n in range(batch):
            sel = jnp.where(jnp.logical_and(n_f == float(n), valid), colsum, 0.0)
            rows.append(jnp.sum(sel, axis=1, keepdims=True))   # (1, 1)
        o_ref[...] = jnp.concatenate(rows, axis=0) * inv_pool + lb_ref[0, 0]

    return kernel


def prepare_inputs(params, batch, height, width):
    """One-time preprocessing: pack conv weights / BN params into single
    arrays and build the per-lane constant rows consumed by the kernel."""
    assert height == POOL_H and width == N_HIDDEN, (
        "AvgPool3d((8, 11, 1)) + Linear(15, 1) imply H == 11 and W == 15")
    m_valid = batch * height * width
    m_pad = ((m_valid + 127) // 128) * 128

    def flat_w(wc):
        # column order = (ky, kx, cin), matching the in-kernel tap/row order
        return jnp.transpose(wc, (0, 2, 3, 1)).reshape(wc.shape[0], -1)

    w0, b0, g0, t0 = params["seq_0"]
    w1, b1, g1, t1 = params["seq_1"]
    w2, b2, g2, t2 = params["seq_2"]
    w3, b3, g3, t3 = params["seq_3"]

    wconv = jnp.zeros((4, COUT, 9 * COUT), jnp.float32)
    wconv = wconv.at[0, :, :9].set(flat_w(w0))          # layer 0: cin = 1
    wconv = wconv.at[1].set(flat_w(w1))
    wconv = wconv.at[2].set(flat_w(w2))
    wconv = wconv.at[3].set(flat_w(w3))

    bnp = jnp.stack([
        jnp.stack([b0, g0, t0]), jnp.stack([b1, g1, t1]),
        jnp.stack([b2, g2, t2]), jnp.stack([b3, g3, t3]),
    ]).reshape(4, 3, COUT, 1)

    # Per-lane constants: flat lane index m = n*H*W + y*W + x.
    idx = np.arange(m_pad)
    valid = idx < m_valid
    xx = np.where(valid, idx % width, -1)
    yy = np.where(valid, (idx % (height * width)) // width, -1)
    nn = np.where(valid, idx // (height * width), -1)
    lin_w = np.asarray(params["lin_w"], np.float32).reshape(width)
    wvec = np.where(valid, lin_w[np.clip(xx, 0, width - 1)], 0.0)
    lane = jnp.asarray(np.stack([wvec, xx, yy, nn]).astype(np.float32))

    arrays = {
        "lane": lane,                                       # (4, m_pad)
        "wconv": wconv,                                     # (4, 8, 72)
        "bnp": bnp,                                         # (4, 3, 8, 1)
        "lin_b": jnp.asarray(params["lin_b"], jnp.float32).reshape(1, 1),
    }
    return {"dims": (batch, height, width, m_valid, m_pad), "arrays": arrays}


@functools.partial(jax.jit, static_argnums=0)
def _forward_impl(dims, arrays, x):
    batch, height, width, m_valid, m_pad = dims
    # (B, 1, H, W) -> (1, B*H*W): contiguous reshape, no pad / transpose launch.
    x_flat = x.reshape(1, m_valid)

    kernel = _make_fused_kernel(batch, height, width, m_valid, m_pad)
    vmem = pl.BlockSpec(memory_space=pltpu.MemorySpace.VMEM)
    smem = pl.BlockSpec(memory_space=pltpu.MemorySpace.SMEM)
    out = pl.pallas_call(
        kernel,
        out_shape=jax.ShapeDtypeStruct((batch, 1), jnp.float32),
        in_specs=[vmem, vmem, vmem, vmem, smem],
        out_specs=vmem,
        scratch_shapes=[pltpu.VMEM((9 * COUT, m_pad), jnp.float32)],
    )(x_flat, arrays["lane"], arrays["wconv"], arrays["bnp"], arrays["lin_b"])
    return out.reshape(batch)   # final .squeeze()


def forward(prepped, x):
    return _forward_impl(prepped["dims"], prepped["arrays"], x)


# ---------------------------------------------------------------------------
# Deterministic parameter init (shapes from the module's __init__)
# ---------------------------------------------------------------------------
def init_params(key):
    def conv_params(k, cin, cout):
        k1, k2, k3, k4 = jax.random.split(k, 4)
        bound = 1.0 / np.sqrt(cin * 9)
        w = jax.random.uniform(k1, (cout, cin, 3, 3), jnp.float32, -bound, bound)
        b = jax.random.uniform(k2, (cout,), jnp.float32, -bound, bound)
        gamma = jnp.ones((cout,), jnp.float32) + 0.1 * jax.random.normal(k3, (cout,), jnp.float32)
        beta = 0.1 * jax.random.normal(k4, (cout,), jnp.float32)
        return (w, b, gamma, beta)

    ks = jax.random.split(key, 6)
    params = {
        "seq_0": conv_params(ks[0], 1, COUT),
        "seq_1": conv_params(ks[1], COUT, COUT),
        "seq_2": conv_params(ks[2], COUT, COUT),
        "seq_3": conv_params(ks[3], COUT, COUT),
    }
    bound = 1.0 / np.sqrt(N_HIDDEN)
    params["lin_w"] = jax.random.uniform(ks[4], (1, N_HIDDEN), jnp.float32, -bound, bound)
    params["lin_b"] = jax.random.uniform(ks[5], (1,), jnp.float32, -bound, bound)
    return params


if __name__ == "__main__":
    key = jax.random.PRNGKey(0)
    k_x, k_p = jax.random.split(key)

    # Shapes implied by the module: Linear(15,1) -> W=15; AvgPool3d((8,11,1)) -> H=11.
    x = jax.random.normal(k_x, (2, 1, POOL_H, N_HIDDEN), dtype=jnp.float32)
    params = init_params(k_p)
    prepped = prepare_inputs(params, batch=2, height=POOL_H, width=N_HIDDEN)

    out = forward(prepped, x)
    out = jax.block_until_ready(out)
    assert out.shape == (2,), out.shape
    print("KERNEL_OK")
</pallas_src>

<mosaic_0001>
module attributes {stable_mosaic.version = 11 : i64} {
  func.func @kernel(%arg0: memref<1x330xf32, #tpu.memory_space<vmem>>, %arg1: memref<4x384xf32, #tpu.memory_space<vmem>>, %arg2: memref<4x8x72xf32, #tpu.memory_space<vmem>>, %arg3: memref<4x3x8x1xf32, #tpu.memory_space<vmem>>, %arg4: memref<1x1xf32, #tpu.memory_space<smem>>, %arg5: memref<2x1xf32, #tpu.memory_space<vmem>>, %arg6: memref<72x384xf32, #tpu.memory_space<vmem>>) attributes {dimension_semantics = [], scalar_prefetch = 0 : i64, scratch_operands = 1 : i64, tpu.core_type = #tpu.core_type<tc>} {
    %c0 = arith.constant 0 : index
    %c0_0 = arith.constant 0 : index
    %0 = vector.load %arg1[%c0, %c0_0] : memref<4x384xf32, #tpu.memory_space<vmem>>, vector<1x384xf32>
    %c1 = arith.constant 1 : index
    %c0_1 = arith.constant 0 : index
    %1 = vector.load %arg1[%c1, %c0_1] : memref<4x384xf32, #tpu.memory_space<vmem>>, vector<1x384xf32>
    %c2 = arith.constant 2 : index
    %c0_2 = arith.constant 0 : index
    %2 = vector.load %arg1[%c2, %c0_2] : memref<4x384xf32, #tpu.memory_space<vmem>>, vector<1x384xf32>
    %c3 = arith.constant 3 : index
    %c0_3 = arith.constant 0 : index
    %3 = vector.load %arg1[%c3, %c0_3] : memref<4x384xf32, #tpu.memory_space<vmem>>, vector<1x384xf32>
    %4 = tpu.iota {dimensions = array<i32: 1>} : vector<1x384xi32>
    %c330_i32 = arith.constant 330 : i32
    %5 = vector.broadcast %c330_i32 : i32 to vector<1x384xi32>
    %6 = arith.cmpi slt, %4, %5 : vector<1x384xi32>
    %cst = arith.constant 1.000000e+00 : f32
    %7 = vector.broadcast %cst : f32 to vector<1x384xf32>
    %8 = arith.cmpf oge, %1, %7 : vector<1x384xf32>
    %cst_4 = arith.constant 1.300000e+01 : f32
    %9 = vector.broadcast %cst_4 : f32 to vector<1x384xf32>
    %10 = arith.cmpf ole, %1, %9 : vector<1x384xf32>
    %cst_5 = arith.constant 1.000000e+00 : f32
    %11 = vector.broadcast %cst_5 : f32 to vector<1x384xf32>
    %12 = arith.cmpf oge, %2, %11 : vector<1x384xf32>
    %cst_6 = arith.constant 9.000000e+00 : f32
    %13 = vector.broadcast %cst_6 : f32 to vector<1x384xf32>
    %14 = arith.cmpf ole, %2, %13 : vector<1x384xf32>
    %c0_7 = arith.constant 0 : index
    %c0_8 = arith.constant 0 : index
    %15 = vector.load %arg0[%c0_7, %c0_8] : memref<1x330xf32, #tpu.memory_space<vmem>>, vector<1x330xf32>
    %cst_9 = arith.constant 0.000000e+00 : f32
    %16 = vector.broadcast %cst_9 : f32 to vector<1x54xf32>
    %17 = tpu.concatenate %15, %16 in 1 : vector<1x330xf32>, vector<1x54xf32> -> vector<1x384xf32>
    %c0_10 = arith.constant 0 : index
    %c0_11 = arith.constant 0 : index
    %c0_12 = arith.constant 0 : index
    %18 = vector.load %arg2[%c0_10, %c0_11, %c0_12] : memref<4x8x72xf32, #tpu.memory_space<vmem>>, vector<1x8x72xf32>
    %19 = vector.shape_cast %18 : vector<1x8x72xf32> to vector<8x72xf32>
    %c0_13 = arith.constant 0 : index
    %c0_14 = arith.constant 0 : index
    %c0_15 = arith.constant 0 : index
    %c0_16 = arith.constant 0 : index
    %20 = vector.load %arg3[%c0_13, %c0_14, %c0_15, %c0_16] : memref<4x3x8x1xf32, #tpu.memory_space<vmem>>, vector<1x1x8x1xf32>
    %21 = vector.shape_cast %20 : vector<1x1x8x1xf32> to vector<8x1xf32>
    %c383_i32 = arith.constant 383 : i32
    %22 = tpu.dynamic_rotate %17 by %c383_i32 dim 1 : vector<1x384xf32>, i32 -> vector<1x384xf32>
    %c1_i32 = arith.constant 1 : i32
    %23 = tpu.dynamic_rotate %17 by %c1_i32 dim 1 : vector<1x384xf32>, i32 -> vector<1x384xf32>
    %24 = arith.select %8, %23, %22 : vector<1x384xi1>, vector<1x384xf32>
    %25 = arith.select %10, %22, %23 : vector<1x384xi1>, vector<1x384xf32>
    %c15_i32 = arith.constant 15 : i32
    %26 = tpu.dynamic_rotate %24 by %c15_i32 dim 1 : vector<1x384xf32>, i32 -> vector<1x384xf32>
    %c369_i32 = arith.constant 369 : i32
    %27 = tpu.dynamic_rotate %24 by %c369_i32 dim 1 : vector<1x384xf32>, i32 -> vector<1x384xf32>
    %28 = arith.select %12, %26, %27 : vector<1x384xi1>, vector<1x384xf32>
    %29 = arith.select %14, %27, %26 : vector<1x384xi1>, vector<1x384xf32>
    %30 = vector.extract_strided_slice %19 {offsets = [0, 0], sizes = [8, 1], strides = [1, 1]} : vector<8x72xf32> to vector<8x1xf32>
    %31 = vector.broadcast %30 : vector<8x1xf32> to vector<8x384xf32>
    %32 = vector.broadcast %28 : vector<1x384xf32> to vector<8x384xf32>
    %33 = arith.mulf %31, %32 : vector<8x384xf32>
    %34 = vector.broadcast %21 : vector<8x1xf32> to vector<8x384xf32>
    %35 = arith.addf %34, %33 : vector<8x384xf32>
    %36 = vector.extract_strided_slice %19 {offsets = [0, 3], sizes = [8, 1], strides = [1, 1]} : vector<8x72xf32> to vector<8x1xf32>
    %37 = vector.broadcast %36 : vector<8x1xf32> to vector<8x384xf32>
    %38 = vector.broadcast %24 : vector<1x384xf32> to vector<8x384xf32>
    %39 = arith.mulf %37, %38 : vector<8x384xf32>
    %40 = arith.addf %35, %39 : vector<8x384xf32>
    %41 = vector.extract_strided_slice %19 {offsets = [0, 6], sizes = [8, 1], strides = [1, 1]} : vector<8x72xf32> to vector<8x1xf32>
    %42 = vector.broadcast %41 : vector<8x1xf32> to vector<8x384xf32>
    %43 = vector.broadcast %29 : vector<1x384xf32> to vector<8x384xf32>
    %44 = arith.mulf %42, %43 : vector<8x384xf32>
    %45 = arith.addf %40, %44 : vector<8x384xf32>
    %c15_i32_17 = arith.constant 15 : i32
    %46 = tpu.dynamic_rotate %17 by %c15_i32_17 dim 1 : vector<1x384xf32>, i32 -> vector<1x384xf32>
    %c369_i32_18 = arith.constant 369 : i32
    %47 = tpu.dynamic_rotate %17 by %c369_i32_18 dim 1 : vector<1x384xf32>, i32 -> vector<1x384xf32>
    %48 = arith.select %12, %46, %47 : vector<1x384xi1>, vector<1x384xf32>
    %49 = arith.select %14, %47, %46 : vector<1x384xi1>, vector<1x384xf32>
    %50 = vector.extract_strided_slice %19 {offsets = [0, 1], sizes = [8, 1], strides = [1, 1]} : vector<8x72xf32> to vector<8x1xf32>
    %51 = vector.broadcast %50 : vector<8x1xf32> to vector<8x384xf32>
    %52 = vector.broadcast %48 : vector<1x384xf32> to vector<8x384xf32>
    %53 = arith.mulf %51, %52 : vector<8x384xf32>
    %54 = arith.addf %45, %53 : vector<8x384xf32>
    %55 = vector.extract_strided_slice %19 {offsets = [0, 4], sizes = [8, 1], strides = [1, 1]} : vector<8x72xf32> to vector<8x1xf32>
    %56 = vector.broadcast %55 : vector<8x1xf32> to vector<8x384xf32>
    %57 = vector.broadcast %17 : vector<1x384xf32> to vector<8x384xf32>
    %58 = arith.mulf %56, %57 : vector<8x384xf32>
    %59 = arith.addf %54, %58 : vector<8x384xf32>
    %60 = vector.extract_strided_slice %19 {offsets = [0, 7], sizes = [8, 1], strides = [1, 1]} : vector<8x72xf32> to vector<8x1xf32>
    %61 = vector.broadcast %60 : vector<8x1xf32> to vector<8x384xf32>
    %62 = vector.broadcast %49 : vector<1x384xf32> to vector<8x384xf32>
    %63 = arith.mulf %61, %62 : vector<8x384xf32>
    %64 = arith.addf %59, %63 : vector<8x384xf32>
    %c15_i32_19 = arith.constant 15 : i32
    %65 = tpu.dynamic_rotate %25 by %c15_i32_19 dim 1 : vector<1x384xf32>, i32 -> vector<1x384xf32>
    %c369_i32_20 = arith.constant 369 : i32
    %66 = tpu.dynamic_rotate %25 by %c369_i32_20 dim 1 : vector<1x384xf32>, i32 -> vector<1x384xf32>
    %67 = arith.select %12, %65, %66 : vector<1x384xi1>, vector<1x384xf32>
    %68 = arith.select %14, %66, %65 : vector<1x384xi1>, vector<1x384xf32>
    %69 = vector.extract_strided_slice %19 {offsets = [0, 2], sizes = [8, 1], strides = [1, 1]} : vector<8x72xf32> to vector<8x1xf32>
    %70 = vector.broadcast %69 : vector<8x1xf32> to vector<8x384xf32>
    %71 = vector.broadcast %67 : vector<1x384xf32> to vector<8x384xf32>
    %72 = arith.mulf %70, %71 : vector<8x384xf32>
    %73 = arith.addf %64, %72 : vector<8x384xf32>
    %74 = vector.extract_strided_slice %19 {offsets = [0, 5], sizes = [8, 1], strides = [1, 1]} : vector<8x72xf32> to vector<8x1xf32>
    %75 = vector.broadcast %74 : vector<8x1xf32> to vector<8x384xf32>
    %76 = vector.broadcast %25 : vector<1x384xf32> to vector<8x384xf32>
    %77 = arith.mulf %75, %76 : vector<8x384xf32>
    %78 = arith.addf %73, %77 : vector<8x384xf32>
    %79 = vector.extract_strided_slice %19 {offsets = [0, 8], sizes = [8, 1], strides = [1, 1]} : vector<8x72xf32> to vector<8x1xf32>
    %80 = vector.broadcast %79 : vector<8x1xf32> to vector<8x384xf32>
    %81 = vector.broadcast %68 : vector<1x384xf32> to vector<8x384xf32>
    %82 = arith.mulf %80, %81 : vector<8x384xf32>
    %83 = arith.addf %78, %82 : vector<8x384xf32>
    %c0_21 = arith.constant 0 : index
    %c1_22 = arith.constant 1 : index
    %c0_23 = arith.constant 0 : index
    %c0_24 = arith.constant 0 : index
    %84 = vector.load %arg3[%c0_21, %c1_22, %c0_23, %c0_24] : memref<4x3x8x1xf32, #tpu.memory_space<vmem>>, vector<1x1x8x1xf32>
    %85 = vector.shape_cast %84 : vector<1x1x8x1xf32> to vector<8x1xf32>
    %c0_25 = arith.constant 0 : index
    %c2_26 = arith.constant 2 : index
    %c0_27 = arith.constant 0 : index
    %c0_28 = arith.constant 0 : index
    %86 = vector.load %arg3[%c0_25, %c2_26, %c0_27, %c0_28] : memref<4x3x8x1xf32, #tpu.memory_space<vmem>>, vector<1x1x8x1xf32>
    %87 = vector.shape_cast %86 : vector<1x1x8x1xf32> to vector<8x1xf32>
    %cst_29 = arith.constant 0.000000e+00 : f32
    %88 = vector.broadcast %cst_29 : f32 to vector<8x384xf32>
    %89 = arith.maximumf %83, %88 : vector<8x384xf32>
    %cst_30 = arith.constant 0.000000e+00 : f32
    %90 = vector.shape_cast %6 : vector<1x384xi1> to vector<1x384xi1>
    %91 = vector.broadcast %90 : vector<1x384xi1> to vector<8x384xi1>
    %92 = vector.broadcast %cst_30 : f32 to vector<8x384xf32>
    %93 = arith.select %91, %89, %92 : vector<8x384xi1>, vector<8x384xf32>
    %cst_31 = arith.constant dense<0.000000e+00> : vector<8xf32>
    %94 = vector.multi_reduction <add>, %93, %cst_31 [1] : vector<8x384xf32> to vector<8xf32>
    %95 = vector.shape_cast %94 : vector<8xf32> to vector<8x1xf32>
    %cst_32 = arith.constant 0.00303030293 : f32
    %96 = vector.broadcast %cst_32 : f32 to vector<8x1xf32>
    %97 = arith.mulf %95, %96 : vector<8x1xf32>
    %98 = arith.mulf %93, %93 : vector<8x384xf32>
    %cst_33 = arith.constant dense<0.000000e+00> : vector<8xf32>
    %99 = vector.multi_reduction <add>, %98, %cst_33 [1] : vector<8x384xf32> to vector<8xf32>
    %100 = vector.shape_cast %99 : vector<8xf32> to vector<8x1xf32>
    %cst_34 = arith.constant 0.00303030293 : f32
    %101 = vector.broadcast %cst_34 : f32 to vector<8x1xf32>
    %102 = arith.mulf %100, %101 : vector<8x1xf32>
    %103 = arith.mulf %97, %97 : vector<8x1xf32>
    %104 = arith.subf %102, %103 : vector<8x1xf32>
    %cst_35 = arith.constant 9.99999974E-6 : f32
    %105 = vector.broadcast %cst_35 : f32 to vector<8x1xf32>
    %106 = arith.addf %104, %105 : vector<8x1xf32>
    %107 = math.rsqrt %106 : vector<8x1xf32>
    %108 = arith.mulf %85, %107 : vector<8x1xf32>
    %109 = vector.broadcast %108 : vector<8x1xf32> to vector<8x384xf32>
    %110 = arith.mulf %109, %93 : vector<8x384xf32>
    %111 = arith.mulf %108, %97 : vector<8x1xf32>
    %112 = arith.subf %87, %111 : vector<8x1xf32>
    %113 = vector.broadcast %112 : vector<8x1xf32> to vector<8x384xf32>
    %114 = arith.addf %110, %113 : vector<8x384xf32>
    %cst_36 = arith.constant 0.000000e+00 : f32
    %115 = vector.shape_cast %6 : vector<1x384xi1> to vector<1x384xi1>
    %116 = vector.broadcast %115 : vector<1x384xi1> to vector<8x384xi1>
    %117 = vector.broadcast %cst_36 : f32 to vector<8x384xf32>
    %118 = arith.select %116, %114, %117 : vector<8x384xi1>, vector<8x384xf32>
    %c383_i32_37 = arith.constant 383 : i32
    %119 = tpu.dynamic_rotate %118 by %c383_i32_37 dim 1 : vector<8x384xf32>, i32 -> vector<8x384xf32>
    %c1_i32_38 = arith.constant 1 : i32
    %120 = tpu.dynamic_rotate %118 by %c1_i32_38 dim 1 : vector<8x384xf32>, i32 -> vector<8x384xf32>
    %121 = vector.shape_cast %8 : vector<1x384xi1> to vector<1x384xi1>
    %122 = vector.broadcast %121 : vector<1x384xi1> to vector<8x384xi1>
    %123 = arith.select %122, %120, %119 : vector<8x384xi1>, vector<8x384xf32>
    %124 = vector.shape_cast %10 : vector<1x384xi1> to vector<1x384xi1>
    %125 = vector.broadcast %124 : vector<1x384xi1> to vector<8x384xi1>
    %126 = arith.select %125, %119, %120 : vector<8x384xi1>, vector<8x384xf32>
    %c15_i32_39 = arith.constant 15 : i32
    %127 = tpu.dynamic_rotate %123 by %c15_i32_39 dim 1 : vector<8x384xf32>, i32 -> vector<8x384xf32>
    %c369_i32_40 = arith.constant 369 : i32
    %128 = tpu.dynamic_rotate %123 by %c369_i32_40 dim 1 : vector<8x384xf32>, i32 -> vector<8x384xf32>
    %129 = vector.shape_cast %12 : vector<1x384xi1> to vector<1x384xi1>
    %130 = vector.broadcast %129 : vector<1x384xi1> to vector<8x384xi1>
    %131 = arith.select %130, %127, %128 : vector<8x384xi1>, vector<8x384xf32>
    %132 = vector.shape_cast %14 : vector<1x384xi1> to vector<1x384xi1>
    %133 = vector.broadcast %132 : vector<1x384xi1> to vector<8x384xi1>
    %134 = arith.select %133, %128, %127 : vector<8x384xi1>, vector<8x384xf32>
    %c0_41 = arith.constant 0 : index
    %c0_42 = arith.constant 0 : index
    %135 = vector.load %arg6[%c0_41, %c0_42] : memref<72x384xf32, #tpu.memory_space<vmem>>, vector<8x384xf32>
    tpu.vector_store %arg6[%c0_41, %c0_42], %131 {strides = array<i32>} : memref<72x384xf32, #tpu.memory_space<vmem>>, vector<8x384xf32>,
    %c24 = arith.constant 24 : index
    %c0_43 = arith.constant 0 : index
    %136 = vector.load %arg6[%c24, %c0_43] : memref<72x384xf32, #tpu.memory_space<vmem>>, vector<8x384xf32>
    tpu.vector_store %arg6[%c24, %c0_43], %123 {strides = array<i32>} : memref<72x384xf32, #tpu.memory_space<vmem>>, vector<8x384xf32>,
    %c48 = arith.constant 48 : index
    %c0_44 = arith.constant 0 : index
    %137 = vector.load %arg6[%c48, %c0_44] : memref<72x384xf32, #tpu.memory_space<vmem>>, vector<8x384xf32>
    tpu.vector_store %arg6[%c48, %c0_44], %134 {strides = array<i32>} : memref<72x384xf32, #tpu.memory_space<vmem>>, vector<8x384xf32>,
    %c15_i32_45 = arith.constant 15 : i32
    %138 = tpu.dynamic_rotate %118 by %c15_i32_45 dim 1 : vector<8x384xf32>, i32 -> vector<8x384xf32>
    %c369_i32_46 = arith.constant 369 : i32
    %139 = tpu.dynamic_rotate %118 by %c369_i32_46 dim 1 : vector<8x384xf32>, i32 -> vector<8x384xf32>
    %140 = vector.shape_cast %12 : vector<1x384xi1> to vector<1x384xi1>
    %141 = vector.broadcast %140 : vector<1x384xi1> to vector<8x384xi1>
    %142 = arith.select %141, %138, %139 : vector<8x384xi1>, vector<8x384xf32>
    %143 = vector.shape_cast %14 : vector<1x384xi1> to vector<1x384xi1>
    %144 = vector.broadcast %143 : vector<1x384xi1> to vector<8x384xi1>
    %145 = arith.select %144, %139, %138 : vector<8x384xi1>, vector<8x384xf32>
    %c8 = arith.constant 8 : index
    %c0_47 = arith.constant 0 : index
    %146 = vector.load %arg6[%c8, %c0_47] : memref<72x384xf32, #tpu.memory_space<vmem>>, vector<8x384xf32>
    tpu.vector_store %arg6[%c8, %c0_47], %142 {strides = array<i32>} : memref<72x384xf32, #tpu.memory_space<vmem>>, vector<8x384xf32>,
    %c32 = arith.constant 32 : index
    %c0_48 = arith.constant 0 : index
    %147 = vector.load %arg6[%c32, %c0_48] : memref<72x384xf32, #tpu.memory_space<vmem>>, vector<8x384xf32>
    tpu.vector_store %arg6[%c32, %c0_48], %118 {strides = array<i32>} : memref<72x384xf32, #tpu.memory_space<vmem>>, vector<8x384xf32>,
    %c56 = arith.constant 56 : index
    %c0_49 = arith.constant 0 : index
    %148 = vector.load %arg6[%c56, %c0_49] : memref<72x384xf32, #tpu.memory_space<vmem>>, vector<8x384xf32>
    tpu.vector_store %arg6[%c56, %c0_49], %145 {strides = array<i32>} : memref<72x384xf32, #tpu.memory_space<vmem>>, vector<8x384xf32>,
    %c15_i32_50 = arith.constant 15 : i32
    %149 = tpu.dynamic_rotate %126 by %c15_i32_50 dim 1 : vector<8x384xf32>, i32 -> vector<8x384xf32>
    %c369_i32_51 = arith.constant 369 : i32
    %150 = tpu.dynamic_rotate %126 by %c369_i32_51 dim 1 : vector<8x384xf32>, i32 -> vector<8x384xf32>
    %151 = vector.shape_cast %12 : vector<1x384xi1> to vector<1x384xi1>
    %152 = vector.broadcast %151 : vector<1x384xi1> to vector<8x384xi1>
    %153 = arith.select %152, %149, %150 : vector<8x384xi1>, vector<8x384xf32>
    %154 = vector.shape_cast %14 : vector<1x384xi1> to vector<1x384xi1>
    %155 = vector.broadcast %154 : vector<1x384xi1> to vector<8x384xi1>
    %156 = arith.select %155, %150, %149 : vector<8x384xi1>, vector<8x384xf32>
    %c16 = arith.constant 16 : index
    %c0_52 = arith.constant 0 : index
    %157 = vector.load %arg6[%c16, %c0_52] : memref<72x384xf32, #tpu.memory_space<vmem>>, vector<8x384xf32>
    tpu.vector_store %arg6[%c16, %c0_52], %153 {strides = array<i32>} : memref<72x384xf32, #tpu.memory_space<vmem>>, vector<8x384xf32>,
    %c40 = arith.constant 40 : index
    %c0_53 = arith.constant 0 : index
    %158 = vector.load %arg6[%c40, %c0_53] : memref<72x384xf32, #tpu.memory_space<vmem>>, vector<8x384xf32>
    tpu.vector_store %arg6[%c40, %c0_53], %126 {strides = array<i32>} : memref<72x384xf32, #tpu.memory_space<vmem>>, vector<8x384xf32>,
    %c64 = arith.constant 64 : index
    %c0_54 = arith.constant 0 : index
    %159 = vector.load %arg6[%c64, %c0_54] : memref<72x384xf32, #tpu.memory_space<vmem>>, vector<8x384xf32>
    tpu.vector_store %arg6[%c64, %c0_54], %156 {strides = array<i32>} : memref<72x384xf32, #tpu.memory_space<vmem>>, vector<8x384xf32>,
    %c1_55 = arith.constant 1 : index
    %c0_56 = arith.constant 0 : index
    %c0_57 = arith.constant 0 : index
    %160 = vector.load %arg2[%c1_55, %c0_56, %c0_57] : memref<4x8x72xf32, #tpu.memory_space<vmem>>, vector<1x8x72xf32>
    %161 = vector.shape_cast %160 : vector<1x8x72xf32> to vector<8x72xf32>
    %c0_58 = arith.constant 0 : index
    %c0_59 = arith.constant 0 : index
    %162 = vector.load %arg6[%c0_58, %c0_59] : memref<72x384xf32, #tpu.memory_space<vmem>>, vector<72x384xf32>
    %cst_60 = arith.constant dense<0.000000e+00> : vector<8x384xf32>
    %163 = tpu.matmul %161, %162, %cst_60 {dimension_numbers = #tpu.dot_dimension_numbers<[1], [0], [0], [1], [0, 0, 1, 1], [], []>} : vector<8x72xf32>, vector<72x384xf32>, vector<8x384xf32> -> vector<8x384xf32>
    %c1_61 = arith.constant 1 : index
    %c0_62 = arith.constant 0 : index
    %c0_63 = arith.constant 0 : index
    %c0_64 = arith.constant 0 : index
    %164 = vector.load %arg3[%c1_61, %c0_62, %c0_63, %c0_64] : memref<4x3x8x1xf32, #tpu.memory_space<vmem>>, vector<1x1x8x1xf32>
    %165 = vector.shape_cast %164 : vector<1x1x8x1xf32> to vector<8x1xf32>
    %166 = vector.broadcast %165 : vector<8x1xf32> to vector<8x384xf32>
    %167 = arith.addf %163, %166 : vector<8x384xf32>
    %c1_65 = arith.constant 1 : index
    %c1_66 = arith.constant 1 : index
    %c0_67 = arith.constant 0 : index
    %c0_68 = arith.constant 0 : index
    %168 = vector.load %arg3[%c1_65, %c1_66, %c0_67, %c0_68] : memref<4x3x8x1xf32, #tpu.memory_space<vmem>>, vector<1x1x8x1xf32>
    %169 = vector.shape_cast %168 : vector<1x1x8x1xf32> to vector<8x1xf32>
    %c1_69 = arith.constant 1 : index
    %c2_70 = arith.constant 2 : index
    %c0_71 = arith.constant 0 : index
    %c0_72 = arith.constant 0 : index
    %170 = vector.load %arg3[%c1_69, %c2_70, %c0_71, %c0_72] : memref<4x3x8x1xf32, #tpu.memory_space<vmem>>, vector<1x1x8x1xf32>
    %171 = vector.shape_cast %170 : vector<1x1x8x1xf32> to vector<8x1xf32>
    %cst_73 = arith.constant 0.000000e+00 : f32
    %172 = vector.broadcast %cst_73 : f32 to vector<8x384xf32>
    %173 = arith.maximumf %167, %172 : vector<8x384xf32>
    %cst_74 = arith.constant 0.000000e+00 : f32
    %174 = vector.shape_cast %6 : vector<1x384xi1> to vector<1x384xi1>
    %175 = vector.broadcast %174 : vector<1x384xi1> to vector<8x384xi1>
    %176 = vector.broadcast %cst_74 : f32 to vector<8x384xf32>
    %177 = arith.select %175, %173, %176 : vector<8x384xi1>, vector<8x384xf32>
    %cst_75 = arith.constant dense<0.000000e+00> : vector<8xf32>
    %178 = vector.multi_reduction <add>, %177, %cst_75 [1] : vector<8x384xf32> to vector<8xf32>
    %179 = vector.shape_cast %178 : vector<8xf32> to vector<8x1xf32>
    %cst_76 = arith.constant 0.00303030293 : f32
    %180 = vector.broadcast %cst_76 : f32 to vector<8x1xf32>
    %181 = arith.mulf %179, %180 : vector<8x1xf32>
    %182 = arith.mulf %177, %177 : vector<8x384xf32>
    %cst_77 = arith.constant dense<0.000000e+00> : vector<8xf32>
    %183 = vector.multi_reduction <add>, %182, %cst_77 [1] : vector<8x384xf32> to vector<8xf32>
    %184 = vector.shape_cast %183 : vector<8xf32> to vector<8x1xf32>
    %cst_78 = arith.constant 0.00303030293 : f32
    %185 = vector.broadcast %cst_78 : f32 to vector<8x1xf32>
    %186 = arith.mulf %184, %185 : vector<8x1xf32>
    %187 = arith.mulf %181, %181 : vector<8x1xf32>
    %188 = arith.subf %186, %187 : vector<8x1xf32>
    %cst_79 = arith.constant 9.99999974E-6 : f32
    %189 = vector.broadcast %cst_79 : f32 to vector<8x1xf32>
    %190 = arith.addf %188, %189 : vector<8x1xf32>
    %191 = math.rsqrt %190 : vector<8x1xf32>
    %192 = arith.mulf %169, %191 : vector<8x1xf32>
    %193 = vector.broadcast %192 : vector<8x1xf32> to vector<8x384xf32>
    %194 = arith.mulf %193, %177 : vector<8x384xf32>
    %195 = arith.mulf %192, %181 : vector<8x1xf32>
    %196 = arith.subf %171, %195 : vector<8x1xf32>
    %197 = vector.broadcast %196 : vector<8x1xf32> to vector<8x384xf32>
    %198 = arith.addf %194, %197 : vector<8x384xf32>
    %cst_80 = arith.constant 0.000000e+00 : f32
    %199 = vector.shape_cast %6 : vector<1x384xi1> to vector<1x384xi1>
    %200 = vector.broadcast %199 : vector<1x384xi1> to vector<8x384xi1>
    %201 = vector.broadcast %cst_80 : f32 to vector<8x384xf32>
    %202 = arith.select %200, %198, %201 : vector<8x384xi1>, vector<8x384xf32>
    %c383_i32_81 = arith.constant 383 : i32
    %203 = tpu.dynamic_rotate %202 by %c383_i32_81 dim 1 : vector<8x384xf32>, i32 -> vector<8x384xf32>
    %c1_i32_82 = arith.constant 1 : i32
    %204 = tpu.dynamic_rotate %202 by %c1_i32_82 dim 1 : vector<8x384xf32>, i32 -> vector<8x384xf32>
    %205 = vector.shape_cast %8 : vector<1x384xi1> to vector<1x384xi1>
    %206 = vector.broadcast %205 : vector<1x384xi1> to vector<8x384xi1>
    %207 = arith.select %206, %204, %203 : vector<8x384xi1>, vector<8x384xf32>
    %208 = vector.shape_cast %10 : vector<1x384xi1> to vector<1x384xi1>
    %209 = vector.broadcast %208 : vector<1x384xi1> to vector<8x384xi1>
    %210 = arith.select %209, %203, %204 : vector<8x384xi1>, vector<8x384xf32>
    %c15_i32_83 = arith.constant 15 : i32
    %211 = tpu.dynamic_rotate %207 by %c15_i32_83 dim 1 : vector<8x384xf32>, i32 -> vector<8x384xf32>
    %c369_i32_84 = arith.constant 369 : i32
    %212 = tpu.dynamic_rotate %207 by %c369_i32_84 dim 1 : vector<8x384xf32>, i32 -> vector<8x384xf32>
    %213 = vector.shape_cast %12 : vector<1x384xi1> to vector<1x384xi1>
    %214 = vector.broadcast %213 : vector<1x384xi1> to vector<8x384xi1>
    %215 = arith.select %214, %211, %212 : vector<8x384xi1>, vector<8x384xf32>
    %216 = vector.shape_cast %14 : vector<1x384xi1> to vector<1x384xi1>
    %217 = vector.broadcast %216 : vector<1x384xi1> to vector<8x384xi1>
    %218 = arith.select %217, %212, %211 : vector<8x384xi1>, vector<8x384xf32>
    %c0_85 = arith.constant 0 : index
    %c0_86 = arith.constant 0 : index
    %219 = vector.load %arg6[%c0_85, %c0_86] : memref<72x384xf32, #tpu.memory_space<vmem>>, vector<8x384xf32>
    tpu.vector_store %arg6[%c0_85, %c0_86], %215 {strides = array<i32>} : memref<72x384xf32, #tpu.memory_space<vmem>>, vector<8x384xf32>,
    %c24_87 = arith.constant 24 : index
    %c0_88 = arith.constant 0 : index
    %220 = vector.load %arg6[%c24_87, %c0_88] : memref<72x384xf32, #tpu.memory_space<vmem>>, vector<8x384xf32>
    tpu.vector_store %arg6[%c24_87, %c0_88], %207 {strides = array<i32>} : memref<72x384xf32, #tpu.memory_space<vmem>>, vector<8x384xf32>,
    %c48_89 = arith.constant 48 : index
    %c0_90 = arith.constant 0 : index
    %221 = vector.load %arg6[%c48_89, %c0_90] : memref<72x384xf32, #tpu.memory_space<vmem>>, vector<8x384xf32>
    tpu.vector_store %arg6[%c48_89, %c0_90], %218 {strides = array<i32>} : memref<72x384xf32, #tpu.memory_space<vmem>>, vector<8x384xf32>,
    %c15_i32_91 = arith.constant 15 : i32
    %222 = tpu.dynamic_rotate %202 by %c15_i32_91 dim 1 : vector<8x384xf32>, i32 -> vector<8x384xf32>
    %c369_i32_92 = arith.constant 369 : i32
    %223 = tpu.dynamic_rotate %202 by %c369_i32_92 dim 1 : vector<8x384xf32>, i32 -> vector<8x384xf32>
    %224 = vector.shape_cast %12 : vector<1x384xi1> to vector<1x384xi1>
    %225 = vector.broadcast %224 : vector<1x384xi1> to vector<8x384xi1>
    %226 = arith.select %225, %222, %223 : vector<8x384xi1>, vector<8x384xf32>
    %227 = vector.shape_cast %14 : vector<1x384xi1> to vector<1x384xi1>
    %228 = vector.broadcast %227 : vector<1x384xi1> to vector<8x384xi1>
    %229 = arith.select %228, %223, %222 : vector<8x384xi1>, vector<8x384xf32>
    %c8_93 = arith.constant 8 : index
    %c0_94 = arith.constant 0 : index
    %230 = vector.load %arg6[%c8_93, %c0_94] : memref<72x384xf32, #tpu.memory_space<vmem>>, vector<8x384xf32>
    tpu.vector_store %arg6[%c8_93, %c0_94], %226 {strides = array<i32>} : memref<72x384xf32, #tpu.memory_space<vmem>>, vector<8x384xf32>,
    %c32_95 = arith.constant 32 : index
    %c0_96 = arith.constant 0 : index
    %231 = vector.load %arg6[%c32_95, %c0_96] : memref<72x384xf32, #tpu.memory_space<vmem>>, vector<8x384xf32>
    tpu.vector_store %arg6[%c32_95, %c0_96], %202 {strides = array<i32>} : memref<72x384xf32, #tpu.memory_space<vmem>>, vector<8x384xf32>,
    %c56_97 = arith.constant 56 : index
    %c0_98 = arith.constant 0 : index
    %232 = vector.load %arg6[%c56_97, %c0_98] : memref<72x384xf32, #tpu.memory_space<vmem>>, vector<8x384xf32>
    tpu.vector_store %arg6[%c56_97, %c0_98], %229 {strides = array<i32>} : memref<72x384xf32, #tpu.memory_space<vmem>>, vector<8x384xf32>,
    %c15_i32_99 = arith.constant 15 : i32
    %233 = tpu.dynamic_rotate %210 by %c15_i32_99 dim 1 : vector<8x384xf32>, i32 -> vector<8x384xf32>
    %c369_i32_100 = arith.constant 369 : i32
    %234 = tpu.dynamic_rotate %210 by %c369_i32_100 dim 1 : vector<8x384xf32>, i32 -> vector<8x384xf32>
    %235 = vector.shape_cast %12 : vector<1x384xi1> to vector<1x384xi1>
    %236 = vector.broadcast %235 : vector<1x384xi1> to vector<8x384xi1>
    %237 = arith.select %236, %233, %234 : vector<8x384xi1>, vector<8x384xf32>
    %238 = vector.shape_cast %14 : vector<1x384xi1> to vector<1x384xi1>
    %239 = vector.broadcast %238 : vector<1x384xi1> to vector<8x384xi1>
    %240 = arith.select %239, %234, %233 : vector<8x384xi1>, vector<8x384xf32>
    %c16_101 = arith.constant 16 : index
    %c0_102 = arith.constant 0 : index
    %241 = vector.load %arg6[%c16_101, %c0_102] : memref<72x384xf32, #tpu.memory_space<vmem>>, vector<8x384xf32>
    tpu.vector_store %arg6[%c16_101, %c0_102], %237 {strides = array<i32>} : memref<72x384xf32, #tpu.memory_space<vmem>>, vector<8x384xf32>,
    %c40_103 = arith.constant 40 : index
    %c0_104 = arith.constant 0 : index
    %242 = vector.load %arg6[%c40_103, %c0_104] : memref<72x384xf32, #tpu.memory_space<vmem>>, vector<8x384xf32>
    tpu.vector_store %arg6[%c40_103, %c0_104], %210 {strides = array<i32>} : memref<72x384xf32, #tpu.memory_space<vmem>>, vector<8x384xf32>,
    %c64_105 = arith.constant 64 : index
    %c0_106 = arith.constant 0 : index
    %243 = vector.load %arg6[%c64_105, %c0_106] : memref<72x384xf32, #tpu.memory_space<vmem>>, vector<8x384xf32>
    tpu.vector_store %arg6[%c64_105, %c0_106], %240 {strides = array<i32>} : memref<72x384xf32, #tpu.memory_space<vmem>>, vector<8x384xf32>,
    %c2_107 = arith.constant 2 : index
    %c0_108 = arith.constant 0 : index
    %c0_109 = arith.constant 0 : index
    %244 = vector.load %arg2[%c2_107, %c0_108, %c0_109] : memref<4x8x72xf32, #tpu.memory_space<vmem>>, vector<1x8x72xf32>
    %245 = vector.shape_cast %244 : vector<1x8x72xf32> to vector<8x72xf32>
    %c0_110 = arith.constant 0 : index
    %c0_111 = arith.constant 0 : index
    %246 = vector.load %arg6[%c0_110, %c0_111] : memref<72x384xf32, #tpu.memory_space<vmem>>, vector<72x384xf32>
    %cst_112 = arith.constant dense<0.000000e+00> : vector<8x384xf32>
    %247 = tpu.matmul %245, %246, %cst_112 {dimension_numbers = #tpu.dot_dimension_numbers<[1], [0], [0], [1], [0, 0, 1, 1], [], []>} : vector<8x72xf32>, vector<72x384xf32>, vector<8x384xf32> -> vector<8x384xf32>
    %c2_113 = arith.constant 2 : index
    %c0_114 = arith.constant 0 : index
    %c0_115 = arith.constant 0 : index
    %c0_116 = arith.constant 0 : index
    %248 = vector.load %arg3[%c2_113, %c0_114, %c0_115, %c0_116] : memref<4x3x8x1xf32, #tpu.memory_space<vmem>>, vector<1x1x8x1xf32>
    %249 = vector.shape_cast %248 : vector<1x1x8x1xf32> to vector<8x1xf32>
    %250 = vector.broadcast %249 : vector<8x1xf32> to vector<8x384xf32>
    %251 = arith.addf %247, %250 : vector<8x384xf32>
    %c2_117 = arith.constant 2 : index
    %c1_118 = arith.constant 1 : index
    %c0_119 = arith.constant 0 : index
    %c0_120 = arith.constant 0 : index
    %252 = vector.load %arg3[%c2_117, %c1_118, %c0_119, %c0_120] : memref<4x3x8x1xf32, #tpu.memory_space<vmem>>, vector<1x1x8x1xf32>
    %253 = vector.shape_cast %252 : vector<1x1x8x1xf32> to vector<8x1xf32>
    %c2_121 = arith.constant 2 : index
    %c2_122 = arith.constant 2 : index
    %c0_123 = arith.constant 0 : index
    %c0_124 = arith.constant 0 : index
    %254 = vector.load %arg3[%c2_121, %c2_122, %c0_123, %c0_124] : memref<4x3x8x1xf32, #tpu.memory_space<vmem>>, vector<1x1x8x1xf32>
    %255 = vector.shape_cast %254 : vector<1x1x8x1xf32> to vector<8x1xf32>
    %cst_125 = arith.constant 0.000000e+00 : f32
    %256 = vector.broadcast %cst_125 : f32 to vector<8x384xf32>
    %257 = arith.maximumf %251, %256 : vector<8x384xf32>
    %cst_126 = arith.constant 0.000000e+00 : f32
    %258 = vector.shape_cast %6 : vector<1x384xi1> to vector<1x384xi1>
    %259 = vector.broadcast %258 : vector<1x384xi1> to vector<8x384xi1>
    %260 = vector.broadcast %cst_126 : f32 to vector<8x384xf32>
    %261 = arith.select %259, %257, %260 : vector<8x384xi1>, vector<8x384xf32>
    %cst_127 = arith.constant dense<0.000000e+00> : vector<8xf32>
    %262 = vector.multi_reduction <add>, %261, %cst_127 [1] : vector<8x384xf32> to vector<8xf32>
    %263 = vector.shape_cast %262 : vector<8xf32> to vector<8x1xf32>
    %cst_128 = arith.constant 0.00303030293 : f32
    %264 = vector.broadcast %cst_128 : f32 to vector<8x1xf32>
    %265 = arith.mulf %263, %264 : vector<8x1xf32>
    %266 = arith.mulf %261, %261 : vector<8x384xf32>
    %cst_129 = arith.constant dense<0.000000e+00> : vector<8xf32>
    %267 = vector.multi_reduction <add>, %266, %cst_129 [1] : vector<8x384xf32> to vector<8xf32>
    %268 = vector.shape_cast %267 : vector<8xf32> to vector<8x1xf32>
    %cst_130 = arith.constant 0.00303030293 : f32
    %269 = vector.broadcast %cst_130 : f32 to vector<8x1xf32>
    %270 = arith.mulf %268, %269 : vector<8x1xf32>
    %271 = arith.mulf %265, %265 : vector<8x1xf32>
    %272 = arith.subf %270, %271 : vector<8x1xf32>
    %cst_131 = arith.constant 9.99999974E-6 : f32
    %273 = vector.broadcast %cst_131 : f32 to vector<8x1xf32>
    %274 = arith.addf %272, %273 : vector<8x1xf32>
    %275 = math.rsqrt %274 : vector<8x1xf32>
    %276 = arith.mulf %253, %275 : vector<8x1xf32>
    %277 = vector.broadcast %276 : vector<8x1xf32> to vector<8x384xf32>
    %278 = arith.mulf %277, %261 : vector<8x384xf32>
    %279 = arith.mulf %276, %265 : vector<8x1xf32>
    %280 = arith.subf %255, %279 : vector<8x1xf32>
    %281 = vector.broadcast %280 : vector<8x1xf32> to vector<8x384xf32>
    %282 = arith.addf %278, %281 : vector<8x384xf32>
    %cst_132 = arith.constant 0.000000e+00 : f32
    %283 = vector.shape_cast %6 : vector<1x384xi1> to vector<1x384xi1>
    %284 = vector.broadcast %283 : vector<1x384xi1> to vector<8x384xi1>
    %285 = vector.broadcast %cst_132 : f32 to vector<8x384xf32>
    %286 = arith.select %284, %282, %285 : vector<8x384xi1>, vector<8x384xf32>
    %cst_133 = arith.constant 0.000000e+00 : f32
    %287 = vector.broadcast %cst_133 : f32 to vector<8x384xf32>
    %c383_i32_134 = arith.constant 383 : i32
    %288 = tpu.dynamic_rotate %286 by %c383_i32_134 dim 1 : vector<8x384xf32>, i32 -> vector<8x384xf32>
    %c1_i32_135 = arith.constant 1 : i32
    %289 = tpu.dynamic_rotate %286 by %c1_i32_135 dim 1 : vector<8x384xf32>, i32 -> vector<8x384xf32>
    %290 = vector.shape_cast %8 : vector<1x384xi1> to vector<1x384xi1>
    %291 = vector.broadcast %290 : vector<1x384xi1> to vector<8x384xi1>
    %292 = arith.select %291, %289, %287 : vector<8x384xi1>, vector<8x384xf32>
    %293 = vector.shape_cast %10 : vector<1x384xi1> to vector<1x384xi1>
    %294 = vector.broadcast %293 : vector<1x384xi1> to vector<8x384xi1>
    %295 = arith.select %294, %288, %287 : vector<8x384xi1>, vector<8x384xf32>
    %c15_i32_136 = arith.constant 15 : i32
    %296 = tpu.dynamic_rotate %292 by %c15_i32_136 dim 1 : vector<8x384xf32>, i32 -> vector<8x384xf32>
    %c369_i32_137 = arith.constant 369 : i32
    %297 = tpu.dynamic_rotate %292 by %c369_i32_137 dim 1 : vector<8x384xf32>, i32 -> vector<8x384xf32>
    %298 = vector.shape_cast %12 : vector<1x384xi1> to vector<1x384xi1>
    %299 = vector.broadcast %298 : vector<1x384xi1> to vector<8x384xi1>
    %300 = arith.select %299, %296, %287 : vector<8x384xi1>, vector<8x384xf32>
    %301 = vector.shape_cast %14 : vector<1x384xi1> to vector<1x384xi1>
    %302 = vector.broadcast %301 : vector<1x384xi1> to vector<8x384xi1>
    %303 = arith.select %302, %297, %287 : vector<8x384xi1>, vector<8x384xf32>
    %c0_138 = arith.constant 0 : index
    %c0_139 = arith.constant 0 : index
    %304 = vector.load %arg6[%c0_138, %c0_139] : memref<72x384xf32, #tpu.memory_space<vmem>>, vector<8x384xf32>
    tpu.vector_store %arg6[%c0_138, %c0_139], %300 {strides = array<i32>} : memref<72x384xf32, #tpu.memory_space<vmem>>, vector<8x384xf32>,
    %c24_140 = arith.constant 24 : index
    %c0_141 = arith.constant 0 : index
    %305 = vector.load %arg6[%c24_140, %c0_141] : memref<72x384xf32, #tpu.memory_space<vmem>>, vector<8x384xf32>
    tpu.vector_store %arg6[%c24_140, %c0_141], %292 {strides = array<i32>} : memref<72x384xf32, #tpu.memory_space<vmem>>, vector<8x384xf32>,
    %c48_142 = arith.constant 48 : index
    %c0_143 = arith.constant 0 : index
    %306 = vector.load %arg6[%c48_142, %c0_143] : memref<72x384xf32, #tpu.memory_space<vmem>>, vector<8x384xf32>
    tpu.vector_store %arg6[%c48_142, %c0_143], %303 {strides = array<i32>} : memref<72x384xf32, #tpu.memory_space<vmem>>, vector<8x384xf32>,
    %c15_i32_144 = arith.constant 15 : i32
    %307 = tpu.dynamic_rotate %286 by %c15_i32_144 dim 1 : vector<8x384xf32>, i32 -> vector<8x384xf32>
    %c369_i32_145 = arith.constant 369 : i32
    %308 = tpu.dynamic_rotate %286 by %c369_i32_145 dim 1 : vector<8x384xf32>, i32 -> vector<8x384xf32>
    %309 = vector.shape_cast %12 : vector<1x384xi1> to vector<1x384xi1>
    %310 = vector.broadcast %309 : vector<1x384xi1> to vector<8x384xi1>
    %311 = arith.select %310, %307, %287 : vector<8x384xi1>, vector<8x384xf32>
    %312 = vector.shape_cast %14 : vector<1x384xi1> to vector<1x384xi1>
    %313 = vector.broadcast %312 : vector<1x384xi1> to vector<8x384xi1>
    %314 = arith.select %313, %308, %287 : vector<8x384xi1>, vector<8x384xf32>
    %c8_146 = arith.constant 8 : index
    %c0_147 = arith.constant 0 : index
    %315 = vector.load %arg6[%c8_146, %c0_147] : memref<72x384xf32, #tpu.memory_space<vmem>>, vector<8x384xf32>
    tpu.vector_store %arg6[%c8_146, %c0_147], %311 {strides = array<i32>} : memref<72x384xf32, #tpu.memory_space<vmem>>, vector<8x384xf32>,
    %c32_148 = arith.constant 32 : index
    %c0_149 = arith.constant 0 : index
    %316 = vector.load %arg6[%c32_148, %c0_149] : memref<72x384xf32, #tpu.memory_space<vmem>>, vector<8x384xf32>
    tpu.vector_store %arg6[%c32_148, %c0_149], %286 {strides = array<i32>} : memref<72x384xf32, #tpu.memory_space<vmem>>, vector<8x384xf32>,
    %c56_150 = arith.constant 56 : index
    %c0_151 = arith.constant 0 : index
    %317 = vector.load %arg6[%c56_150, %c0_151] : memref<72x384xf32, #tpu.memory_space<vmem>>, vector<8x384xf32>
    tpu.vector_store %arg6[%c56_150, %c0_151], %314 {strides = array<i32>} : memref<72x384xf32, #tpu.memory_space<vmem>>, vector<8x384xf32>,
    %c15_i32_152 = arith.constant 15 : i32
    %318 = tpu.dynamic_rotate %295 by %c15_i32_152 dim 1 : vector<8x384xf32>, i32 -> vector<8x384xf32>
    %c369_i32_153 = arith.constant 369 : i32
    %319 = tpu.dynamic_rotate %295 by %c369_i32_153 dim 1 : vector<8x384xf32>, i32 -> vector<8x384xf32>
    %320 = vector.shape_cast %12 : vector<1x384xi1> to vector<1x384xi1>
    %321 = vector.broadcast %320 : vector<1x384xi1> to vector<8x384xi1>
    %322 = arith.select %321, %318, %287 : vector<8x384xi1>, vector<8x384xf32>
    %323 = vector.shape_cast %14 : vector<1x384xi1> to vector<1x384xi1>
    %324 = vector.broadcast %323 : vector<1x384xi1> to vector<8x384xi1>
    %325 = arith.select %324, %319, %287 : vector<8x384xi1>, vector<8x384xf32>
    %c16_154 = arith.constant 16 : index
    %c0_155 = arith.constant 0 : index
    %326 = vector.load %arg6[%c16_154, %c0_155] : memref<72x384xf32, #tpu.memory_space<vmem>>, vector<8x384xf32>
    tpu.vector_store %arg6[%c16_154, %c0_155], %322 {strides = array<i32>} : memref<72x384xf32, #tpu.memory_space<vmem>>, vector<8x384xf32>,
    %c40_156 = arith.constant 40 : index
    %c0_157 = arith.constant 0 : index
    %327 = vector.load %arg6[%c40_156, %c0_157] : memref<72x384xf32, #tpu.memory_space<vmem>>, vector<8x384xf32>
    tpu.vector_store %arg6[%c40_156, %c0_157], %295 {strides = array<i32>} : memref<72x384xf32, #tpu.memory_space<vmem>>, vector<8x384xf32>,
    %c64_158 = arith.constant 64 : index
    %c0_159 = arith.constant 0 : index
    %328 = vector.load %arg6[%c64_158, %c0_159] : memref<72x384xf32, #tpu.memory_space<vmem>>, vector<8x384xf32>
    tpu.vector_store %arg6[%c64_158, %c0_159], %325 {strides = array<i32>} : memref<72x384xf32, #tpu.memory_space<vmem>>, vector<8x384xf32>,
    %c3_160 = arith.constant 3 : index
    %c0_161 = arith.constant 0 : index
    %c0_162 = arith.constant 0 : index
    %329 = vector.load %arg2[%c3_160, %c0_161, %c0_162] : memref<4x8x72xf32, #tpu.memory_space<vmem>>, vector<1x8x72xf32>
    %330 = vector.shape_cast %329 : vector<1x8x72xf32> to vector<8x72xf32>
    %c0_163 = arith.constant 0 : index
    %c0_164 = arith.constant 0 : index
    %331 = vector.load %arg6[%c0_163, %c0_164] : memref<72x384xf32, #tpu.memory_space<vmem>>, vector<72x384xf32>
    %cst_165 = arith.constant dense<0.000000e+00> : vector<8x384xf32>
    %332 = tpu.matmul %330, %331, %cst_165 {dimension_numbers = #tpu.dot_dimension_numbers<[1], [0], [0], [1], [0, 0, 1, 1], [], []>} : vector<8x72xf32>, vector<72x384xf32>, vector<8x384xf32> -> vector<8x384xf32>
    %c3_166 = arith.constant 3 : index
    %c0_167 = arith.constant 0 : index
    %c0_168 = arith.constant 0 : index
    %c0_169 = arith.constant 0 : index
    %333 = vector.load %arg3[%c3_166, %c0_167, %c0_168, %c0_169] : memref<4x3x8x1xf32, #tpu.memory_space<vmem>>, vector<1x1x8x1xf32>
    %334 = vector.shape_cast %333 : vector<1x1x8x1xf32> to vector<8x1xf32>
    %335 = vector.broadcast %334 : vector<8x1xf32> to vector<8x384xf32>
    %336 = arith.addf %332, %335 : vector<8x384xf32>
    %c3_170 = arith.constant 3 : index
    %c1_171 = arith.constant 1 : index
    %c0_172 = arith.constant 0 : index
    %c0_173 = arith.constant 0 : index
    %337 = vector.load %arg3[%c3_170, %c1_171, %c0_172, %c0_173] : memref<4x3x8x1xf32, #tpu.memory_space<vmem>>, vector<1x1x8x1xf32>
    %338 = vector.shape_cast %337 : vector<1x1x8x1xf32> to vector<8x1xf32>
    %c3_174 = arith.constant 3 : index
    %c2_175 = arith.constant 2 : index
    %c0_176 = arith.constant 0 : index
    %c0_177 = arith.constant 0 : index
    %339 = vector.load %arg3[%c3_174, %c2_175, %c0_176, %c0_177] : memref<4x3x8x1xf32, #tpu.memory_space<vmem>>, vector<1x1x8x1xf32>
    %340 = vector.shape_cast %339 : vector<1x1x8x1xf32> to vector<8x1xf32>
    %cst_178 = arith.constant 0.000000e+00 : f32
    %341 = vector.broadcast %cst_178 : f32 to vector<8x384xf32>
    %342 = arith.maximumf %336, %341 : vector<8x384xf32>
    %cst_179 = arith.constant 0.000000e+00 : f32
    %343 = vector.shape_cast %6 : vector<1x384xi1> to vector<1x384xi1>
    %344 = vector.broadcast %343 : vector<1x384xi1> to vector<8x384xi1>
    %345 = vector.broadcast %cst_179 : f32 to vector<8x384xf32>
    %346 = arith.select %344, %342, %345 : vector<8x384xi1>, vector<8x384xf32>
    %cst_180 = arith.constant dense<0.000000e+00> : vector<8xf32>
    %347 = vector.multi_reduction <add>, %346, %cst_180 [1] : vector<8x384xf32> to vector<8xf32>
    %348 = vector.shape_cast %347 : vector<8xf32> to vector<8x1xf32>
    %cst_181 = arith.constant 0.00303030293 : f32
    %349 = vector.broadcast %cst_181 : f32 to vector<8x1xf32>
    %350 = arith.mulf %348, %349 : vector<8x1xf32>
    %351 = arith.mulf %346, %346 : vector<8x384xf32>
    %cst_182 = arith.constant dense<0.000000e+00> : vector<8xf32>
    %352 = vector.multi_reduction <add>, %351, %cst_182 [1] : vector<8x384xf32> to vector<8xf32>
    %353 = vector.shape_cast %352 : vector<8xf32> to vector<8x1xf32>
    %cst_183 = arith.constant 0.00303030293 : f32
    %354 = vector.broadcast %cst_183 : f32 to vector<8x1xf32>
    %355 = arith.mulf %353, %354 : vector<8x1xf32>
    %356 = arith.mulf %350, %350 : vector<8x1xf32>
    %357 = arith.subf %355, %356 : vector<8x1xf32>
    %cst_184 = arith.constant 9.99999974E-6 : f32
    %358 = vector.broadcast %cst_184 : f32 to vector<8x1xf32>
    %359 = arith.addf %357, %358 : vector<8x1xf32>
    %360 = math.rsqrt %359 : vector<8x1xf32>
    %361 = arith.mulf %338, %360 : vector<8x1xf32>
    %362 = vector.broadcast %361 : vector<8x1xf32> to vector<8x384xf32>
    %363 = arith.mulf %362, %346 : vector<8x384xf32>
    %364 = arith.mulf %361, %350 : vector<8x1xf32>
    %365 = arith.subf %340, %364 : vector<8x1xf32>
    %366 = vector.broadcast %365 : vector<8x1xf32> to vector<8x384xf32>
    %367 = arith.addf %363, %366 : vector<8x384xf32>
    %cst_185 = arith.constant 0.000000e+00 : f32
    %368 = vector.shape_cast %6 : vector<1x384xi1> to vector<1x384xi1>
    %369 = vector.broadcast %368 : vector<1x384xi1> to vector<8x384xi1>
    %370 = vector.broadcast %cst_185 : f32 to vector<8x384xf32>
    %371 = arith.select %369, %367, %370 : vector<8x384xi1>, vector<8x384xf32>
    %372 = vector.broadcast %0 : vector<1x384xf32> to vector<8x384xf32>
    %373 = arith.mulf %371, %372 : vector<8x384xf32>
    %cst_186 = arith.constant dense<0.000000e+00> : vector<384xf32>
    %374 = vector.multi_reduction <add>, %373, %cst_186 [0] : vector<8x384xf32> to vector<384xf32>
    %375 = vector.shape_cast %374 : vector<384xf32> to vector<1x384xf32>
    %cst_187 = arith.constant 0.000000e+00 : f32
    %376 = vector.broadcast %cst_187 : f32 to vector<1x384xf32>
    %377 = arith.cmpf oeq, %3, %376 : vector<1x384xf32>
    %378 = arith.andi %377, %6 : vector<1x384xi1>
    %cst_188 = arith.constant 0.000000e+00 : f32
    %379 = vector.broadcast %cst_188 : f32 to vector<1x384xf32>
    %380 = arith.select %378, %375, %379 : vector<1x384xi1>, vector<1x384xf32>
    %cst_189 = arith.constant dense<0.000000e+00> : vector<1xf32>
    %381 = vector.multi_reduction <add>, %380, %cst_189 [1] : vector<1x384xf32> to vector<1xf32>
    %382 = vector.shape_cast %381 : vector<1xf32> to vector<1x1xf32>
    %cst_190 = arith.constant 1.000000e+00 : f32
    %383 = vector.broadcast %cst_190 : f32 to vector<1x384xf32>
    %384 = arith.cmpf oeq, %3, %383 : vector<1x384xf32>
    %385 = arith.andi %384, %6 : vector<1x384xi1>
    %cst_191 = arith.constant 0.000000e+00 : f32
    %386 = vector.broadcast %cst_191 : f32 to vector<1x384xf32>
    %387 = arith.select %385, %375, %386 : vector<1x384xi1>, vector<1x384xf32>
    %cst_192 = arith.constant dense<0.000000e+00> : vector<1xf32>
    %388 = vector.multi_reduction <add>, %387, %cst_192 [1] : vector<1x384xf32> to vector<1xf32>
    %389 = vector.shape_cast %388 : vector<1xf32> to vector<1x1xf32>
    %390 = tpu.concatenate %382, %389 in 0 : vector<1x1xf32>, vector<1x1xf32> -> vector<2x1xf32>
    %cst_193 = arith.constant 0.0113636367 : f32
    %391 = vector.broadcast %cst_193 : f32 to vector<2x1xf32>
    %392 = arith.mulf %390, %391 : vector<2x1xf32>
    %c0_194 = arith.constant 0 : index
    %c0_195 = arith.constant 0 : index
    %393 = memref.load %arg4[%c0_194, %c0_195] : memref<1x1xf32, #tpu.memory_space<smem>>
    %394 = vector.broadcast %393 : f32 to vector<2x1xf32>
    %395 = arith.addf %392, %394 : vector<2x1xf32>
    %c0_196 = arith.constant 0 : index
    %c0_197 = arith.constant 0 : index
    %396 = vector.load %arg5[%c0_196, %c0_197] : memref<2x1xf32, #tpu.memory_space<vmem>>, vector<2x1xf32>
    tpu.vector_store %arg5[%c0_196, %c0_197], %395 {strides = array<i32>} : memref<2x1xf32, #tpu.memory_space<vmem>>, vector<2x1xf32>,
    return
  }
}

</mosaic_0001>

<llo_original>
// kernel: _forward_impl.1
$region0: #{_forward_impl.1}
  #allocation0 [shape = 'u32[]', space=smem, size = 0x4, offset = 0x4, fixed_abs, tag = 'smem constant byte address 0x4 - core index']
  #allocation1 [shape = 'u32[72,128]{1,0:T(1,128)}', space=vmem, size = 0x9000, scoped, tag = 'internal scratch']
  #allocation2 [shape = 'f32[72,384]{1,0:T(8,128)}', space=vmem, size = 0x1b000, scoped, tag = 'scratch operand']
  #allocation3 [shape = 'f32[1,1]{1,0:T(1,128)S(6)}', space=smem, size = 0x200, scoped, tag = 'scoped memory for _forward_impl.1']
  %s0 = inlined_call_operand.vmem [shape: f32[1,330], index: 0, kind: input, shape index: {}]
  %s1 = inlined_call_operand.vmem [shape: f32[4,384], index: 1, kind: input, shape index: {}]
  %s2 = inlined_call_operand.vmem [shape: f32[4,8,72], index: 2, kind: input, shape index: {}]
  %s3 = inlined_call_operand.vmem [shape: f32[4,3,8,1], index: 3, kind: input, shape index: {}]
  %s4 = inlined_call_operand.<no memory space> [shape: f32[1,1], index: 4, kind: input, shape index: {}]
  %s5 = inlined_call_operand.vmem [shape: f32[2,1], index: 5, kind: output, shape index: {}]
  %s6 = sld [smem:[#allocation0]]
  $region30: #{_forward_impl.1} parent=0
    _
  %s8 = ssub.s32 1, %s6
  %s9 = scalar_select 0, %s8, %s6
  %10 = sst [smem:[#allocation3]] %s4
  // Predicated region
  $region2: #{_forward_impl.1} parent=0 // pred_check
    _
  $region3: #{_forward_impl.1} parent=0 // pred_check_branch
    %12 = sbr.rel (0) target = $region5
  $region4: #{_forward_impl.1} parent=0 // pred_region
    _
  $region5: #{_forward_impl.1} parent=0 // pred_fallthru
    _
  // Predicated region
  $region6: #{_forward_impl.1} parent=0 // pred_check
    _
  $region7: #{_forward_impl.1} parent=0 // pred_check_branch
    %14 = sbr.rel (0) target = $region9
  $region8: #{_forward_impl.1} parent=0 // pred_region
    _
  $region9: #{_forward_impl.1} parent=0 // pred_fallthru
    _
  // Predicated region
  $region10: #{_forward_impl.1} parent=0 // pred_check
    _
  $region11: #{_forward_impl.1} parent=0 // pred_check_branch
    %16 = sbr.rel (0) target = $region13
  $region12: #{_forward_impl.1} parent=0 // pred_region
    _
  $region13: #{_forward_impl.1} parent=0 // pred_fallthru
    _
  // Predicated region
  $region14: #{_forward_impl.1} parent=0 // pred_check
    _
  $region15: #{_forward_impl.1} parent=0 // pred_check_branch
    %18 = sbr.rel (0) target = $region17
  $region16: #{_forward_impl.1} parent=0 // pred_region
    _
  $region17: #{_forward_impl.1} parent=0 // pred_fallthru
    _
  // Predicated region
  $region18: #{_forward_impl.1} parent=0 // pred_check
    _
  $region19: #{_forward_impl.1} parent=0 // pred_check_branch
    %20 = sbr.rel (0) target = $region21
  $region20: #{_forward_impl.1} parent=0 // pred_region
    _
  $region21: #{_forward_impl.1} parent=0 // pred_fallthru
    _
  %v21 = vld [vmem:[%s1] ss:$4 sm:$0x7]
  %s22 = scalar_lea.vmem %s1, 1
  %v23 = vld [vmem:[%s22] ss:$4 sm:$0x7]
  %s24 = scalar_lea.vmem %s1, 2
  %v25 = vld [vmem:[%s24] ss:$4 sm:$0x7]
  %s26 = scalar_lea.vmem %s1, 3
  %v27 = vld [vmem:[%s26] ss:$4 sm:$0x7]
  %v28 = vlaneseq
  %v29 = vand.u32 %v28, 127
  %v30 = vadd.s32 %v29, 128
  %v31 = vadd.s32 %v29, 256
  %vm32 = vcmp.lt.s32.totalorder %v29, 330
  %vm33 = vcmp.lt.s32.totalorder %v30, 330
  %vm34 = vcmp.lt.s32.totalorder %v31, 330
  %vm35 = vcmp.ge.f32.partialorder %v23, 1.0
  %vm36 = vcmp.le.f32.partialorder %v23, 13.0
  %vm37 = vcmp.ge.f32.partialorder %v25, 1.0
  %vm38 = vcmp.le.f32.partialorder %v25, 9.0
  %v39 = vld [vmem:[%s0] sm:$0x7]
  %v41 = vperm.slane %v39, 0
  %v42 = vperm.slane %v39, 1
  %v43 = vperm.slane %v39, 2
  %vm47 = vcmask 605184
  %v48 = vsel %vm47, %v43, 0.0
  %v49 = vld [vmem:[%s2] sm:$0xff]
  %v50 = vld [vmem:[%s3] sm:$0xff]
  %51 = vrot.lane.b32.xlu0 %v41, 127
  %v52 = vpop.permute.xlu0 %51
  %53 = vrot.lane.b32.xlu0 %v42, 127
  %v54 = vpop.permute.xlu0 %53
  %55 = vrot.lane.b32.xlu0 %v48, 127
  %v56 = vpop.permute.xlu0 %55
  %vm57 = vcmp.lt.s32.totalorder %v29, 127
  %v58 = vsel %vm57, %v54, %v56
  %v59 = vsel %vm57, %v52, %v54
  %v60 = vsel %vm57, %v56, %v52
  %61 = vrot.lane.b32.xlu0 %v41, 1
  %v62 = vpop.permute.xlu0 %61
  %63 = vrot.lane.b32.xlu0 %v42, 1
  %v64 = vpop.permute.xlu0 %63
  %65 = vrot.lane.b32.xlu0 %v48, 1
  %v66 = vpop.permute.xlu0 %65
  %vm67 = vcmp.lt.s32.totalorder %v29, 1
  %v68 = vsel %vm67, %v64, %v66
  %v69 = vsel %vm67, %v62, %v64
  %v70 = vsel %vm67, %v66, %v62
  %v74 = vrot.slane %v69, 7
  %v75 = vrot.slane %v68, 6
  %vm76 = vcmask 1040384
  %v77 = vsel %vm76, %v70, %v74
  %vm78 = vcmask 1041408
  %v79 = vsel %vm78, %v77, %v75
  %v84 = vrot.slane %v58, 7
  %v85 = vrot.slane %v60, 6
  %v86 = vsel %vm76, %v59, %v84
  %v87 = vsel %vm78, %v86, %v85
  %v89 = vsel %vm35, %v79, %v87
  %v90 = vsel %vm36, %v87, %v79
  %v92 = vperm.slane %v89, 0
  %v93 = vperm.slane %v89, 1
  %v94 = vperm.slane %v89, 2
  %98 = vrot.lane.b32.xlu0 %v92, 15
  %v99 = vpop.permute.xlu0 %98
  %100 = vrot.lane.b32.xlu0 %v93, 15
  %v101 = vpop.permute.xlu0 %100
  %102 = vrot.lane.b32.xlu0 %v94, 15
  %v103 = vpop.permute.xlu0 %102
  %vm104 = vcmp.lt.s32.totalorder %v29, 15
  %v105 = vsel %vm104, %v101, %v103
  %v106 = vsel %vm104, %v99, %v101
  %v107 = vsel %vm104, %v103, %v99
  %108 = vrot.lane.b32.xlu0 %v92, 113
  %v109 = vpop.permute.xlu0 %108
  %110 = vrot.lane.b32.xlu0 %v93, 113
  %v111 = vpop.permute.xlu0 %110
  %112 = vrot.lane.b32.xlu0 %v94, 113
  %v113 = vpop.permute.xlu0 %112
  %vm114 = vcmp.lt.s32.totalorder %v29, 113
  %v115 = vsel %vm114, %v111, %v113
  %v116 = vsel %vm114, %v109, %v111
  %v117 = vsel %vm114, %v113, %v109
  %v121 = vrot.slane %v106, 7
  %v122 = vrot.slane %v105, 6
  %v123 = vsel %vm76, %v107, %v121
  %v124 = vsel %vm78, %v123, %v122
  %v129 = vrot.slane %v115, 7
  %v130 = vrot.slane %v117, 6
  %v131 = vsel %vm76, %v116, %v129
  %v132 = vsel %vm78, %v131, %v130
  %v134 = vsel %vm37, %v124, %v132
  %v135 = vsel %vm38, %v132, %v124
  %137 = vset.pattern.permute.xlu0 0
  %138 = vperm.xlu0 %137, %v49
  %v139 = vpop.permute.xlu0 %138
  %v142 = vperm.slane %v134, 0
  %v143 = vperm.slane %v134, 1
  %v144 = vperm.slane %v134, 2
  %v148 = vmul.f32 %v139, %v142
  %v149 = vmul.f32 %v139, %v143
  %v150 = vmul.f32 %v139, %v144
  %152 = vset.pattern.permute.xlu0 0
  %153 = vperm.xlu0 %152, %v50
  %v154 = vpop.permute.xlu0 %153
  %v156 = vadd.f32 %v154, %v148
  %v157 = vadd.f32 %v154, %v149
  %v158 = vadd.f32 %v154, %v150
  %159 = vset.pattern.permute.xlu0 3
  %160 = vperm.xlu0 %159, %v49
  %v161 = vpop.permute.xlu0 %160
  %v163 = vmul.f32 %v161, %v92
  %v164 = vmul.f32 %v161, %v93
  %v165 = vmul.f32 %v161, %v94
  %v166 = vadd.f32 %v156, %v163
  %v167 = vadd.f32 %v157, %v164
  %v168 = vadd.f32 %v158, %v165
  %169 = vset.pattern.permute.xlu0 6
  %170 = vperm.xlu0 %169, %v49
  %v171 = vpop.permute.xlu0 %170
  %v174 = vperm.slane %v135, 0
  %v175 = vperm.slane %v135, 1
  %v176 = vperm.slane %v135, 2
  %v180 = vmul.f32 %v171, %v174
  %v181 = vmul.f32 %v171, %v175
  %v182 = vmul.f32 %v171, %v176
  %v183 = vadd.f32 %v166, %v180
  %v184 = vadd.f32 %v167, %v181
  %v185 = vadd.f32 %v168, %v182
  %186 = vrot.lane.b32.xlu0 %v41, 15
  %v187 = vpop.permute.xlu0 %186
  %188 = vrot.lane.b32.xlu0 %v42, 15
  %v189 = vpop.permute.xlu0 %188
  %190 = vrot.lane.b32.xlu0 %v48, 15
  %v191 = vpop.permute.xlu0 %190
  %v192 = vsel %vm104, %v189, %v191
  %v193 = vsel %vm104, %v187, %v189
  %v194 = vsel %vm104, %v191, %v187
  %195 = vrot.lane.b32.xlu0 %v41, 113
  %v196 = vpop.permute.xlu0 %195
  %197 = vrot.lane.b32.xlu0 %v42, 113
  %v198 = vpop.permute.xlu0 %197
  %199 = vrot.lane.b32.xlu0 %v48, 113
  %v200 = vpop.permute.xlu0 %199
  %v201 = vsel %vm114, %v198, %v200
  %v202 = vsel %vm114, %v196, %v198
  %v203 = vsel %vm114, %v200, %v196
  %v207 = vrot.slane %v193, 7
  %v208 = vrot.slane %v192, 6
  %v209 = vsel %vm76, %v194, %v207
  %v210 = vsel %vm78, %v209, %v208
  %v215 = vrot.slane %v201, 7
  %v216 = vrot.slane %v203, 6
  %v217 = vsel %vm76, %v202, %v215
  %v218 = vsel %vm78, %v217, %v216
  %v220 = vsel %vm37, %v210, %v218
  %v221 = vsel %vm38, %v218, %v210
  %222 = vset.pattern.permute.xlu0 1
  %223 = vperm.xlu0 %222, %v49
  %v224 = vpop.permute.xlu0 %223
  %v227 = vperm.slane %v220, 0
  %v228 = vperm.slane %v220, 1
  %v229 = vperm.slane %v220, 2
  %v233 = vmul.f32 %v224, %v227
  %v234 = vmul.f32 %v224, %v228
  %v235 = vmul.f32 %v224, %v229
  %v236 = vadd.f32 %v183, %v233
  %v237 = vadd.f32 %v184, %v234
  %v238 = vadd.f32 %v185, %v235
  %239 = vset.pattern.permute.xlu0 4
  %240 = vperm.xlu0 %239, %v49
  %v241 = vpop.permute.xlu0 %240
  %v243 = vperm.slane %v41, 0
  %v244 = vperm.slane %v42, 0
  %v245 = vperm.slane %v48, 0
  %v246 = vmul.f32 %v241, %v243
  %v247 = vmul.f32 %v241, %v244
  %v248 = vmul.f32 %v241, %v245
  %v249 = vadd.f32 %v236, %v246
  %v250 = vadd.f32 %v237, %v247
  %v251 = vadd.f32 %v238, %v248
  %252 = vset.pattern.permute.xlu0 7
  %253 = vperm.xlu0 %252, %v49
  %v254 = vpop.permute.xlu0 %253
  %v257 = vperm.slane %v221, 0
  %v258 = vperm.slane %v221, 1
  %v259 = vperm.slane %v221, 2
  %v263 = vmul.f32 %v254, %v257
  %v264 = vmul.f32 %v254, %v258
  %v265 = vmul.f32 %v254, %v259
  %v266 = vadd.f32 %v249, %v263
  %v267 = vadd.f32 %v250, %v264
  %v268 = vadd.f32 %v251, %v265
  %v270 = vperm.slane %v90, 0
  %v271 = vperm.slane %v90, 1
  %v272 = vperm.slane %v90, 2
  %276 = vrot.lane.b32.xlu0 %v270, 15
  %v277 = vpop.permute.xlu0 %276
  %278 = vrot.lane.b32.xlu0 %v271, 15
  %v279 = vpop.permute.xlu0 %278
  %280 = vrot.lane.b32.xlu0 %v272, 15
  %v281 = vpop.permute.xlu0 %280
  %v282 = vsel %vm104, %v279, %v281
  %v283 = vsel %vm104, %v277, %v279
  %v284 = vsel %vm104, %v281, %v277
  %285 = vrot.lane.b32.xlu0 %v270, 113
  %v286 = vpop.permute.xlu0 %285
  %287 = vrot.lane.b32.xlu0 %v271, 113
  %v288 = vpop.permute.xlu0 %287
  %289 = vrot.lane.b32.xlu0 %v272, 113
  %v290 = vpop.permute.xlu0 %289
  %v291 = vsel %vm114, %v288, %v290
  %v292 = vsel %vm114, %v286, %v288
  %v293 = vsel %vm114, %v290, %v286
  %v297 = vrot.slane %v283, 7
  %v298 = vrot.slane %v282, 6
  %v299 = vsel %vm76, %v284, %v297
  %v300 = vsel %vm78, %v299, %v298
  %v305 = vrot.slane %v291, 7
  %v306 = vrot.slane %v293, 6
  %v307 = vsel %vm76, %v292, %v305
  %v308 = vsel %vm78, %v307, %v306
  %v310 = vsel %vm37, %v300, %v308
  %v311 = vsel %vm38, %v308, %v300
  %312 = vset.pattern.permute.xlu0 2
  %313 = vperm.xlu0 %312, %v49
  %v314 = vpop.permute.xlu0 %313
  %v317 = vperm.slane %v310, 0
  %v318 = vperm.slane %v310, 1
  %v319 = vperm.slane %v310, 2
  %v323 = vmul.f32 %v314, %v317
  %v324 = vmul.f32 %v314, %v318
  %v325 = vmul.f32 %v314, %v319
  %v326 = vadd.f32 %v266, %v323
  %v327 = vadd.f32 %v267, %v324
  %v328 = vadd.f32 %v268, %v325
  %329 = vset.pattern.permute.xlu0 5
  %330 = vperm.xlu0 %329, %v49
  %v331 = vpop.permute.xlu0 %330
  %v333 = vmul.f32 %v331, %v270
  %v334 = vmul.f32 %v331, %v271
  %v335 = vmul.f32 %v331, %v272
  %v336 = vadd.f32 %v326, %v333
  %v337 = vadd.f32 %v327, %v334
  %v338 = vadd.f32 %v328, %v335
  %339 = vset.pattern.permute.xlu0 8
  %340 = vperm.xlu0 %339, %v49
  %v341 = vpop.permute.xlu0 %340
  %v344 = vperm.slane %v311, 0
  %v345 = vperm.slane %v311, 1
  %v346 = vperm.slane %v311, 2
  %v350 = vmul.f32 %v341, %v344
  %v351 = vmul.f32 %v341, %v345
  %v352 = vmul.f32 %v341, %v346
  %v353 = vadd.f32 %v336, %v350
  %v354 = vadd.f32 %v337, %v351
  %v355 = vadd.f32 %v338, %v352
  %s356 = scalar_lea.vmem %s3, 8
  %v357 = vld [vmem:[%s356] sm:$0xff]
  %s358 = scalar_lea.vmem %s3, 16
  %v359 = vld [vmem:[%s358] sm:$0xff]
  %v360 = vmax.f32 %v353, 0.0
  %v361 = vmax.f32 %v354, 0.0
  %v362 = vmax.f32 %v355, 0.0
  %v363 = vsel %vm32, 1, 0
  %v364 = vsel %vm33, 1, 0
  %v365 = vsel %vm34, 1, 0
  %vm366 = vcmp.eq.s32.totalorder %v363, 1
  %vm367 = vcmp.eq.s32.totalorder %v364, 1
  %vm368 = vcmp.eq.s32.totalorder %v365, 1
  %v369 = vsel %vm366, %v360, 0.0
  %v370 = vsel %vm367, %v361, 0.0
  %v371 = vsel %vm368, %v362, 0.0
  %v372 = vadd.f32 %v369, %v370
  %v373 = vadd.f32 %v372, %v371
  %374 = vadd.xlane.f32.xlu0 %v373
  %v375 = vpop.xlane.xlu0 %374
  %v376 = vmul.f32 %v375, 0.003030303
  %v377 = vmul.f32 %v369, %v369
  %v378 = vmul.f32 %v370, %v370
  %v379 = vmul.f32 %v371, %v371
  %v380 = vadd.f32 %v377, %v378
  %v381 = vadd.f32 %v380, %v379
  %382 = vadd.xlane.f32.xlu0 %v381
  %v383 = vpop.xlane.xlu0 %382
  %v384 = vmul.f32 %v383, 0.003030303
  %v385 = vmul.f32 %v376, %v376
  %v386 = vsub.f32 %v384, %v385
  %v387 = vadd.f32 %v386, 1e-05
  %v388 = vrsqrt.pop %v387
  %v389 = vmul.f32 %v388, %v387
  %v390 = vmul.f32 %v389, %v388
  %v391 = vmul.f32 0.5, %v390
  %v392 = vsub.f32 1.5, %v391
  %v393 = vmul.f32 %v388, %v392
  %vm394 = vweird.f32 %v387
  %vm395 = vweird.f32 %v388
  %vm396 = vmor %vm394, %vm395
  %v397 = vsel %vm396, %v388, %v393
  %v398 = vmul.f32 %v357, %v397
  %400 = vset.pattern.permute.xlu0 0
  %401 = vperm.xlu0 %400, %v398
  %v402 = vpop.permute.xlu0 %401
  %v404 = vmul.f32 %v402, %v369
  %v405 = vmul.f32 %v402, %v370
  %v406 = vmul.f32 %v402, %v371
  %v407 = vmul.f32 %v398, %v376
  %v408 = vsub.f32 %v359, %v407
  %410 = vset.pattern.permute.xlu0 0
  %411 = vperm.xlu0 %410, %v408
  %v412 = vpop.permute.xlu0 %411
  %v414 = vadd.f32 %v404, %v412
  %v415 = vadd.f32 %v405, %v412
  %v416 = vadd.f32 %v406, %v412
  %v417 = vsel %vm366, %v414, 0.0
  %v418 = vsel %vm367, %v415, 0.0
  %v419 = vsel %vm368, %v416, 0.0
  %420 = vrot.lane.b32.xlu0 %v417, 127
  %v421 = vpop.permute.xlu0 %420
  %422 = vrot.lane.b32.xlu0 %v418, 127
  %v423 = vpop.permute.xlu0 %422
  %424 = vrot.lane.b32.xlu0 %v419, 127
  %v425 = vpop.permute.xlu0 %424
  %v426 = vsel %vm57, %v423, %v425
  %v427 = vsel %vm57, %v421, %v423
  %v428 = vsel %vm57, %v425, %v421
  %429 = vrot.lane.b32.xlu0 %v417, 1
  %v430 = vpop.permute.xlu0 %429
  %431 = vrot.lane.b32.xlu0 %v418, 1
  %v432 = vpop.permute.xlu0 %431
  %433 = vrot.lane.b32.xlu0 %v419, 1
  %v434 = vpop.permute.xlu0 %433
  %v435 = vsel %vm67, %v432, %v434
  %v436 = vsel %vm67, %v430, %v432
  %v437 = vsel %vm67, %v434, %v430
  %v438 = vsel %vm35, 1, 0
  %v439 = vperm.slane %v438, 0
  %v440 = vperm.slane %v438, 1
  %v441 = vperm.slane %v438, 2
  %vm442 = vcmp.eq.s32.totalorder %v439, 1
  %vm443 = vcmp.eq.s32.totalorder %v440, 1
  %vm444 = vcmp.eq.s32.totalorder %v441, 1
  %v445 = vsel %vm442, %v437, %v427
  %v446 = vsel %vm443, %v436, %v426
  %v447 = vsel %vm444, %v435, %v428
  %v448 = vsel %vm36, 1, 0
  %v449 = vperm.slane %v448, 0
  %v450 = vperm.slane %v448, 1
  %v451 = vperm.slane %v448, 2
  %vm452 = vcmp.eq.s32.totalorder %v449, 1
  %vm453 = vcmp.eq.s32.totalorder %v450, 1
  %vm454 = vcmp.eq.s32.totalorder %v451, 1
  %v455 = vsel %vm452, %v427, %v437
  %v456 = vsel %vm453, %v426, %v436
  %v457 = vsel %vm454, %v428, %v435
  %458 = vrot.lane.b32.xlu0 %v445, 15
  %v459 = vpop.permute.xlu0 %458
  %460 = vrot.lane.b32.xlu0 %v446, 15
  %v461 = vpop.permute.xlu0 %460
  %462 = vrot.lane.b32.xlu0 %v447, 15
  %v463 = vpop.permute.xlu0 %462
  %v464 = vsel %vm104, %v461, %v463
  %v465 = vsel %vm104, %v459, %v461
  %v466 = vsel %vm104, %v463, %v459
  %467 = vrot.lane.b32.xlu0 %v445, 113
  %v468 = vpop.permute.xlu0 %467
  %469 = vrot.lane.b32.xlu0 %v446, 113
  %v470 = vpop.permute.xlu0 %469
  %471 = vrot.lane.b32.xlu0 %v447, 113
  %v472 = vpop.permute.xlu0 %471
  %v473 = vsel %vm114, %v470, %v472
  %v474 = vsel %vm114, %v468, %v470
  %v475 = vsel %vm114, %v472, %v468
  %v476 = vsel %vm37, 1, 0
  %v477 = vperm.slane %v476, 0
  %v478 = vperm.slane %v476, 1
  %v479 = vperm.slane %v476, 2
  %vm480 = vcmp.eq.s32.totalorder %v477, 1
  %vm481 = vcmp.eq.s32.totalorder %v478, 1
  %vm482 = vcmp.eq.s32.totalorder %v479, 1
  %v483 = vsel %vm480, %v466, %v474
  %v484 = vsel %vm481, %v465, %v473
  %v485 = vsel %vm482, %v464, %v475
  %v486 = vsel %vm38, 1, 0
  %v487 = vperm.slane %v486, 0
  %v488 = vperm.slane %v486, 1
  %v489 = vperm.slane %v486, 2
  %vm490 = vcmp.eq.s32.totalorder %v487, 1
  %vm491 = vcmp.eq.s32.totalorder %v488, 1
  %vm492 = vcmp.eq.s32.totalorder %v489, 1
  %v493 = vsel %vm490, %v474, %v466
  %v494 = vsel %vm491, %v473, %v465
  %v495 = vsel %vm492, %v475, %v464
  %496 = vst [vmem:[#allocation2] sm:$0xff] %v483
  %497 = vst [vmem:[#allocation2 + $0x8] sm:$0xff] %v484
  %498 = vst [vmem:[#allocation2 + $0x10] sm:$0xff] %v485
  %499 = vst [vmem:[#allocation2 + $0x48] sm:$0xff] %v445
  %500 = vst [vmem:[#allocation2 + $0x50] sm:$0xff] %v446
  %501 = vst [vmem:[#allocation2 + $0x58] sm:$0xff] %v447
  %502 = vst [vmem:[#allocation2 + $0x90] sm:$0xff] %v493
  %503 = vst [vmem:[#allocation2 + $0x98] sm:$0xff] %v494
  %504 = vst [vmem:[#allocation2 + $0xa0] sm:$0xff] %v495
  %505 = vrot.lane.b32.xlu0 %v417, 15
  %v506 = vpop.permute.xlu0 %505
  %507 = vrot.lane.b32.xlu0 %v418, 15
  %v508 = vpop.permute.xlu0 %507
  %509 = vrot.lane.b32.xlu0 %v419, 15
  %v510 = vpop.permute.xlu0 %509
  %v511 = vsel %vm104, %v508, %v510
  %v512 = vsel %vm104, %v506, %v508
  %v513 = vsel %vm104, %v510, %v506
  %514 = vrot.lane.b32.xlu0 %v417, 113
  %v515 = vpop.permute.xlu0 %514
  %516 = vrot.lane.b32.xlu0 %v418, 113
  %v517 = vpop.permute.xlu0 %516
  %518 = vrot.lane.b32.xlu0 %v419, 113
  %v519 = vpop.permute.xlu0 %518
  %v520 = vsel %vm114, %v517, %v519
  %v521 = vsel %vm114, %v515, %v517
  %v522 = vsel %vm114, %v519, %v515
  %v523 = vsel %vm480, %v513, %v521
  %v524 = vsel %vm481, %v512, %v520
  %v525 = vsel %vm482, %v511, %v522
  %v526 = vsel %vm490, %v521, %v513
  %v527 = vsel %vm491, %v520, %v512
  %v528 = vsel %vm492, %v522, %v511
  %529 = vst [vmem:[#allocation2 + $0x18] sm:$0xff] %v523
  %530 = vst [vmem:[#allocation2 + $0x20] sm:$0xff] %v524
  %531 = vst [vmem:[#allocation2 + $0x28] sm:$0xff] %v525
  %532 = vst [vmem:[#allocation2 + $0x60] sm:$0xff] %v417
  %533 = vst [vmem:[#allocation2 + $0x68] sm:$0xff] %v418
  %534 = vst [vmem:[#allocation2 + $0x70] sm:$0xff] %v419
  %535 = vst [vmem:[#allocation2 + $0xa8] sm:$0xff] %v526
  %536 = vst [vmem:[#allocation2 + $0xb0] sm:$0xff] %v527
  %537 = vst [vmem:[#allocation2 + $0xb8] sm:$0xff] %v528
  %538 = vrot.lane.b32.xlu0 %v455, 15
  %v539 = vpop.permute.xlu0 %538
  %540 = vrot.lane.b32.xlu0 %v456, 15
  %v541 = vpop.permute.xlu0 %540
  %542 = vrot.lane.b32.xlu0 %v457, 15
  %v543 = vpop.permute.xlu0 %542
  %v544 = vsel %vm104, %v541, %v543
  %v545 = vsel %vm104, %v539, %v541
  %v546 = vsel %vm104, %v543, %v539
  %547 = vrot.lane.b32.xlu0 %v455, 113
  %v548 = vpop.permute.xlu0 %547
  %549 = vrot.lane.b32.xlu0 %v456, 113
  %v550 = vpop.permute.xlu0 %549
  %551 = vrot.lane.b32.xlu0 %v457, 113
  %v552 = vpop.permute.xlu0 %551
  %v553 = vsel %vm114, %v550, %v552
  %v554 = vsel %vm114, %v548, %v550
  %v555 = vsel %vm114, %v552, %v548
  %v556 = vsel %vm480, %v546, %v554
  %v557 = vsel %vm481, %v545, %v553
  %v558 = vsel %vm482, %v544, %v555
  %v559 = vsel %vm490, %v554, %v546
  %v560 = vsel %vm491, %v553, %v545
  %v561 = vsel %vm492, %v555, %v544
  %562 = vst [vmem:[#allocation2 + $0x30] sm:$0xff] %v556
  %563 = vst [vmem:[#allocation2 + $0x38] sm:$0xff] %v557
  %564 = vst [vmem:[#allocation2 + $0x40] sm:$0xff] %v558
  %565 = vst [vmem:[#allocation2 + $0x78] sm:$0xff] %v455
  %566 = vst [vmem:[#allocation2 + $0x80] sm:$0xff] %v456
  %567 = vst [vmem:[#allocation2 + $0x88] sm:$0xff] %v457
  %568 = vst [vmem:[#allocation2 + $0xc0] sm:$0xff] %v559
  %569 = vst [vmem:[#allocation2 + $0xc8] sm:$0xff] %v560
  %570 = vst [vmem:[#allocation2 + $0xd0] sm:$0xff] %v561
  %s571 = scalar_lea.vmem %s2, 8
  %v572 = vld [vmem:[%s571] sm:$0xff]
  %v573 = vld [vmem:[#allocation2] sm:$0xff]
  %v574 = vld [vmem:[#allocation2 + $0x8] sm:$0xff]
  %v575 = vld [vmem:[#allocation2 + $0x10] sm:$0xff]
  %v576 = vld [vmem:[#allocation2 + $0x18] sm:$0xff]
  %v577 = vld [vmem:[#allocation2 + $0x20] sm:$0xff]
  %v578 = vld [vmem:[#allocation2 + $0x28] sm:$0xff]
  %v579 = vld [vmem:[#allocation2 + $0x30] sm:$0xff]
  %v580 = vld [vmem:[#allocation2 + $0x38] sm:$0xff]
  %v581 = vld [vmem:[#allocation2 + $0x40] sm:$0xff]
  %v582 = vld [vmem:[#allocation2 + $0x48] sm:$0xff]
  %v583 = vld [vmem:[#allocation2 + $0x50] sm:$0xff]
  %v584 = vld [vmem:[#allocation2 + $0x58] sm:$0xff]
  %v585 = vld [vmem:[#allocation2 + $0x60] sm:$0xff]
  %v586 = vld [vmem:[#allocation2 + $0x68] sm:$0xff]
  %v587 = vld [vmem:[#allocation2 + $0x70] sm:$0xff]
  %v588 = vld [vmem:[#allocation2 + $0x78] sm:$0xff]
  %v589 = vld [vmem:[#allocation2 + $0x80] sm:$0xff]
  %v590 = vld [vmem:[#allocation2 + $0x88] sm:$0xff]
  %v591 = vld [vmem:[#allocation2 + $0x90] sm:$0xff]
  %v592 = vld [vmem:[#allocation2 + $0x98] sm:$0xff]
  %v593 = vld [vmem:[#allocation2 + $0xa0] sm:$0xff]
  %v594 = vld [vmem:[#allocation2 + $0xa8] sm:$0xff]
  %v595 = vld [vmem:[#allocation2 + $0xb0] sm:$0xff]
  %v596 = vld [vmem:[#allocation2 + $0xb8] sm:$0xff]
  %v597 = vld [vmem:[#allocation2 + $0xc0] sm:$0xff]
  %v598 = vld [vmem:[#allocation2 + $0xc8] sm:$0xff]
  %v599 = vld [vmem:[#allocation2 + $0xd0] sm:$0xff]
  %s600 = scalar_lea.vmem %s3, 24
  %v601 = vld [vmem:[%s600] sm:$0xff]
  %603 = vset.pattern.permute.xlu0 0
  %604 = vperm.xlu0 %603, %v601
  %v605 = vpop.permute.xlu0 %604
  %vm607 = vcmask 588800
  %v609 = vsel %vm607, %v572, 0
  %611 = vmatpush.msra.mxu0 0.0
  %612 = vmatpush.msra.mxu0 0.0
  %613 = vmatpush.msra.mxu0 0.0
  %614 = vmatpush.msra.mxu0 0.0
  %615 = vmatpush.msra.mxu0 0.0
  %616 = vmatpush.msra.mxu0 0.0
  %617 = vmatpush.msra.mxu0 0.0
  %618 = vmatpush.msra.mxu0 %v597
  %619 = vmatpush.msra.mxu0 %v594
  %620 = vmatpush.msra.mxu0 %v591
  %621 = vmatpush.msra.mxu0 %v588
  %622 = vmatpush.msra.mxu0 %v585
  %623 = vmatpush.msra.mxu0 %v582
  %624 = vmatpush.msra.mxu0 %v579
  %625 = vmatpush.msra.mxu0 %v576
  %626 = vmatpush.msra.mxu0 %v573
  %627 = vmatmul.f32.gmra.mxu0 %v609
  %v628 = vpop.f32.mrf.mxu0
  %v629 = vadd.f32 %v605, %v628
  %630 = vdwg.mxu0
  %631 = vmatpush.msra.mxu0 0.0
  %632 = vmatpush.msra.mxu0 0.0
  %633 = vmatpush.msra.mxu0 0.0
  %634 = vmatpush.msra.mxu0 0.0
  %635 = vmatpush.msra.mxu0 0.0
  %636 = vmatpush.msra.mxu0 0.0
  %637 = vmatpush.msra.mxu0 0.0
  %638 = vmatpush.msra.mxu0 %v598
  %639 = vmatpush.msra.mxu0 %v595
  %640 = vmatpush.msra.mxu0 %v592
  %641 = vmatpush.msra.mxu0 %v589
  %642 = vmatpush.msra.mxu0 %v586
  %643 = vmatpush.msra.mxu0 %v583
  %644 = vmatpush.msra.mxu0 %v580
  %645 = vmatpush.msra.mxu0 %v577
  %646 = vmatpush.msra.mxu0 %v574
  %647 = vmatmul.f32.gmra.mxu0 %v609
  %v648 = vpop.f32.mrf.mxu0
  %v649 = vadd.f32 %v605, %v648
  %650 = vdwg.mxu0
  %651 = vmatpush.msra.mxu0 0.0
  %652 = vmatpush.msra.mxu0 0.0
  %653 = vmatpush.msra.mxu0 0.0
  %654 = vmatpush.msra.mxu0 0.0
  %655 = vmatpush.msra.mxu0 0.0
  %656 = vmatpush.msra.mxu0 0.0
  %657 = vmatpush.msra.mxu0 0.0
  %658 = vmatpush.msra.mxu0 %v599
  %659 = vmatpush.msra.mxu0 %v596
  %660 = vmatpush.msra.mxu0 %v593
  %661 = vmatpush.msra.mxu0 %v590
  %662 = vmatpush.msra.mxu0 %v587
  %663 = vmatpush.msra.mxu0 %v584
  %664 = vmatpush.msra.mxu0 %v581
  %665 = vmatpush.msra.mxu0 %v578
  %666 = vmatpush.msra.mxu0 %v575
  %667 = vmatmul.f32.gmra.mxu0 %v609
  %v668 = vpop.f32.mrf.mxu0
  %v669 = vadd.f32 %v605, %v668
  %670 = vdwg.mxu0
  %s671 = scalar_lea.vmem %s3, 32
  %v672 = vld [vmem:[%s671] sm:$0xff]
  %s673 = scalar_lea.vmem %s3, 40
  %v674 = vld [vmem:[%s673] sm:$0xff]
  %v675 = vmax.f32 %v629, 0.0
  %v676 = vmax.f32 %v649, 0.0
  %v677 = vmax.f32 %v669, 0.0
  %v678 = vsel %vm366, %v675, 0.0
  %v679 = vsel %vm367, %v676, 0.0
  %v680 = vsel %vm368, %v677, 0.0
  %v681 = vadd.f32 %v678, %v679
  %v682 = vadd.f32 %v681, %v680
  %683 = vadd.xlane.f32.xlu0 %v682
  %v684 = vpop.xlane.xlu0 %683
  %v685 = vmul.f32 %v684, 0.003030303
  %v686 = vmul.f32 %v678, %v678
  %v687 = vmul.f32 %v679, %v679
  %v688 = vmul.f32 %v680, %v680
  %v689 = vadd.f32 %v686, %v687
  %v690 = vadd.f32 %v689, %v688
  %691 = vadd.xlane.f32.xlu0 %v690
  %v692 = vpop.xlane.xlu0 %691
  %v693 = vmul.f32 %v692, 0.003030303
  %v694 = vmul.f32 %v685, %v685
  %v695 = vsub.f32 %v693, %v694
  %v696 = vadd.f32 %v695, 1e-05
  %v697 = vrsqrt.pop %v696
  %v698 = vmul.f32 %v697, %v696
  %v699 = vmul.f32 %v698, %v697
  %v700 = vmul.f32 0.5, %v699
  %v701 = vsub.f32 1.5, %v700
  %v702 = vmul.f32 %v697, %v701
  %vm703 = vweird.f32 %v696
  %vm704 = vweird.f32 %v697
  %vm705 = vmor %vm703, %vm704
  %v706 = vsel %vm705, %v697, %v702
  %v707 = vmul.f32 %v672, %v706
  %709 = vset.pattern.permute.xlu0 0
  %710 = vperm.xlu0 %709, %v707
  %v711 = vpop.permute.xlu0 %710
  %v713 = vmul.f32 %v711, %v678
  %v714 = vmul.f32 %v711, %v679
  %v715 = vmul.f32 %v711, %v680
  %v716 = vmul.f32 %v707, %v685
  %v717 = vsub.f32 %v674, %v716
  %719 = vset.pattern.permute.xlu0 0
  %720 = vperm.xlu0 %719, %v717
  %v721 = vpop.permute.xlu0 %720
  %v723 = vadd.f32 %v713, %v721
  %v724 = vadd.f32 %v714, %v721
  %v725 = vadd.f32 %v715, %v721
  %v726 = vsel %vm366, %v723, 0.0
  %v727 = vsel %vm367, %v724, 0.0
  %v728 = vsel %vm368, %v725, 0.0
  %729 = vrot.lane.b32.xlu0 %v726, 127
  %v730 = vpop.permute.xlu0 %729
  %731 = vrot.lane.b32.xlu0 %v727, 127
  %v732 = vpop.permute.xlu0 %731
  %733 = vrot.lane.b32.xlu0 %v728, 127
  %v734 = vpop.permute.xlu0 %733
  %v735 = vsel %vm57, %v732, %v734
  %v736 = vsel %vm57, %v730, %v732
  %v737 = vsel %vm57, %v734, %v730
  %738 = vrot.lane.b32.xlu0 %v726, 1
  %v739 = vpop.permute.xlu0 %738
  %740 = vrot.lane.b32.xlu0 %v727, 1
  %v741 = vpop.permute.xlu0 %740
  %742 = vrot.lane.b32.xlu0 %v728, 1
  %v743 = vpop.permute.xlu0 %742
  %v744 = vsel %vm67, %v741, %v743
  %v745 = vsel %vm67, %v739, %v741
  %v746 = vsel %vm67, %v743, %v739
  %v747 = vsel %vm442, %v746, %v736
  %v748 = vsel %vm443, %v745, %v735
  %v749 = vsel %vm444, %v744, %v737
  %v750 = vsel %vm452, %v736, %v746
  %v751 = vsel %vm453, %v735, %v745
  %v752 = vsel %vm454, %v737, %v744
  %753 = vrot.lane.b32.xlu0 %v747, 15
  %v754 = vpop.permute.xlu0 %753
  %755 = vrot.lane.b32.xlu0 %v748, 15
  %v756 = vpop.permute.xlu0 %755
  %757 = vrot.lane.b32.xlu0 %v749, 15
  %v758 = vpop.permute.xlu0 %757
  %v759 = vsel %vm104, %v756, %v758
  %v760 = vsel %vm104, %v754, %v756
  %v761 = vsel %vm104, %v758, %v754
  %762 = vrot.lane.b32.xlu0 %v747, 113
  %v763 = vpop.permute.xlu0 %762
  %764 = vrot.lane.b32.xlu0 %v748, 113
  %v765 = vpop.permute.xlu0 %764
  %766 = vrot.lane.b32.xlu0 %v749, 113
  %v767 = vpop.permute.xlu0 %766
  %v768 = vsel %vm114, %v765, %v767
  %v769 = vsel %vm114, %v763, %v765
  %v770 = vsel %vm114, %v767, %v763
  %v771 = vsel %vm480, %v761, %v769
  %v772 = vsel %vm481, %v760, %v768
  %v773 = vsel %vm482, %v759, %v770
  %v774 = vsel %vm490, %v769, %v761
  %v775 = vsel %vm491, %v768, %v760
  %v776 = vsel %vm492, %v770, %v759
  %777 = vst [vmem:[#allocation2] sm:$0xff] %v771
  %778 = vst [vmem:[#allocation2 + $0x8] sm:$0xff] %v772
  %779 = vst [vmem:[#allocation2 + $0x10] sm:$0xff] %v773
  %780 = vst [vmem:[#allocation2 + $0x48] sm:$0xff] %v747
  %781 = vst [vmem:[#allocation2 + $0x50] sm:$0xff] %v748
  %782 = vst [vmem:[#allocation2 + $0x58] sm:$0xff] %v749
  %783 = vst [vmem:[#allocation2 + $0x90] sm:$0xff] %v774
  %784 = vst [vmem:[#allocation2 + $0x98] sm:$0xff] %v775
  %785 = vst [vmem:[#allocation2 + $0xa0] sm:$0xff] %v776
  %786 = vrot.lane.b32.xlu0 %v726, 15
  %v787 = vpop.permute.xlu0 %786
  %788 = vrot.lane.b32.xlu0 %v727, 15
  %v789 = vpop.permute.xlu0 %788
  %790 = vrot.lane.b32.xlu0 %v728, 15
  %v791 = vpop.permute.xlu0 %790
  %v792 = vsel %vm104, %v789, %v791
  %v793 = vsel %vm104, %v787, %v789
  %v794 = vsel %vm104, %v791, %v787
  %795 = vrot.lane.b32.xlu0 %v726, 113
  %v796 = vpop.permute.xlu0 %795
  %797 = vrot.lane.b32.xlu0 %v727, 113
  %v798 = vpop.permute.xlu0 %797
  %799 = vrot.lane.b32.xlu0 %v728, 113
  %v800 = vpop.permute.xlu0 %799
  %v801 = vsel %vm114, %v798, %v800
  %v802 = vsel %vm114, %v796, %v798
  %v803 = vsel %vm114, %v800, %v796
  %v804 = vsel %vm480, %v794, %v802
  %v805 = vsel %vm481, %v793, %v801
  %v806 = vsel %vm482, %v792, %v803
  %v807 = vsel %vm490, %v802, %v794
  %v808 = vsel %vm491, %v801, %v793
  %v809 = vsel %vm492, %v803, %v792
  %810 = vst [vmem:[#allocation2 + $0x18] sm:$0xff] %v804
  %811 = vst [vmem:[#allocation2 + $0x20] sm:$0xff] %v805
  %812 = vst [vmem:[#allocation2 + $0x28] sm:$0xff] %v806
  %813 = vst [vmem:[#allocation2 + $0x60] sm:$0xff] %v726
  %814 = vst [vmem:[#allocation2 + $0x68] sm:$0xff] %v727
  %815 = vst [vmem:[#allocation2 + $0x70] sm:$0xff] %v728
  %816 = vst [vmem:[#allocation2 + $0xa8] sm:$0xff] %v807
  %817 = vst [vmem:[#allocation2 + $0xb0] sm:$0xff] %v808
  %818 = vst [vmem:[#allocation2 + $0xb8] sm:$0xff] %v809
  %819 = vrot.lane.b32.xlu0 %v750, 15
  %v820 = vpop.permute.xlu0 %819
  %821 = vrot.lane.b32.xlu0 %v751, 15
  %v822 = vpop.permute.xlu0 %821
  %823 = vrot.lane.b32.xlu0 %v752, 15
  %v824 = vpop.permute.xlu0 %823
  %v825 = vsel %vm104, %v822, %v824
  %v826 = vsel %vm104, %v820, %v822
  %v827 = vsel %vm104, %v824, %v820
  %828 = vrot.lane.b32.xlu0 %v750, 113
  %v829 = vpop.permute.xlu0 %828
  %830 = vrot.lane.b32.xlu0 %v751, 113
  %v831 = vpop.permute.xlu0 %830
  %832 = vrot.lane.b32.xlu0 %v752, 113
  %v833 = vpop.permute.xlu0 %832
  %v834 = vsel %vm114, %v831, %v833
  %v835 = vsel %vm114, %v829, %v831
  %v836 = vsel %vm114, %v833, %v829
  %v837 = vsel %vm480, %v827, %v835
  %v838 = vsel %vm481, %v826, %v834
  %v839 = vsel %vm482, %v825, %v836
  %v840 = vsel %vm490, %v835, %v827
  %v841 = vsel %vm491, %v834, %v826
  %v842 = vsel %vm492, %v836, %v825
  %843 = vst [vmem:[#allocation2 + $0x30] sm:$0xff] %v837
  %844 = vst [vmem:[#allocation2 + $0x38] sm:$0xff] %v838
  %845 = vst [vmem:[#allocation2 + $0x40] sm:$0xff] %v839
  %846 = vst [vmem:[#allocation2 + $0x78] sm:$0xff] %v750
  %847 = vst [vmem:[#allocation2 + $0x80] sm:$0xff] %v751
  %848 = vst [vmem:[#allocation2 + $0x88] sm:$0xff] %v752
  %849 = vst [vmem:[#allocation2 + $0xc0] sm:$0xff] %v840
  %850 = vst [vmem:[#allocation2 + $0xc8] sm:$0xff] %v841
  %851 = vst [vmem:[#allocation2 + $0xd0] sm:$0xff] %v842
  %s852 = scalar_lea.vmem %s2, 16
  %v853 = vld [vmem:[%s852] sm:$0xff]
  %v854 = vld [vmem:[#allocation2] sm:$0xff]
  %v855 = vld [vmem:[#allocation2 + $0x8] sm:$0xff]
  %v856 = vld [vmem:[#allocation2 + $0x10] sm:$0xff]
  %v857 = vld [vmem:[#allocation2 + $0x18] sm:$0xff]
  %v858 = vld [vmem:[#allocation2 + $0x20] sm:$0xff]
  %v859 = vld [vmem:[#allocation2 + $0x28] sm:$0xff]
  %v860 = vld [vmem:[#allocation2 + $0x30] sm:$0xff]
  %v861 = vld [vmem:[#allocation2 + $0x38] sm:$0xff]
  %v862 = vld [vmem:[#allocation2 + $0x40] sm:$0xff]
  %v863 = vld [vmem:[#allocation2 + $0x48] sm:$0xff]
  %v864 = vld [vmem:[#allocation2 + $0x50] sm:$0xff]
  %v865 = vld [vmem:[#allocation2 + $0x58] sm:$0xff]
  %v866 = vld [vmem:[#allocation2 + $0x60] sm:$0xff]
  %v867 = vld [vmem:[#allocation2 + $0x68] sm:$0xff]
  %v868 = vld [vmem:[#allocation2 + $0x70] sm:$0xff]
  %v869 = vld [vmem:[#allocation2 + $0x78] sm:$0xff]
  %v870 = vld [vmem:[#allocation2 + $0x80] sm:$0xff]
  %v871 = vld [vmem:[#allocation2 + $0x88] sm:$0xff]
  %v872 = vld [vmem:[#allocation2 + $0x90] sm:$0xff]
  %v873 = vld [vmem:[#allocation2 + $0x98] sm:$0xff]
  %v874 = vld [vmem:[#allocation2 + $0xa0] sm:$0xff]
  %v875 = vld [vmem:[#allocation2 + $0xa8] sm:$0xff]
  %v876 = vld [vmem:[#allocation2 + $0xb0] sm:$0xff]
  %v877 = vld [vmem:[#allocation2 + $0xb8] sm:$0xff]
  %v878 = vld [vmem:[#allocation2 + $0xc0] sm:$0xff]
  %v879 = vld [vmem:[#allocation2 + $0xc8] sm:$0xff]
  %v880 = vld [vmem:[#allocation2 + $0xd0] sm:$0xff]
  %s881 = scalar_lea.vmem %s3, 48
  %v882 = vld [vmem:[%s881] sm:$0xff]
  %884 = vset.pattern.permute.xlu0 0
  %885 = vperm.xlu0 %884, %v882
  %v886 = vpop.permute.xlu0 %885
  %v889 = vsel %vm607, %v853, 0
  %891 = vmatpush.msra.mxu0 0.0
  %892 = vmatpush.msra.mxu0 0.0
  %893 = vmatpush.msra.mxu0 0.0
  %894 = vmatpush.msra.mxu0 0.0
  %895 = vmatpush.msra.mxu0 0.0
  %896 = vmatpush.msra.mxu0 0.0
  %897 = vmatpush.msra.mxu0 0.0
  %898 = vmatpush.msra.mxu0 %v878
  %899 = vmatpush.msra.mxu0 %v875
  %900 = vmatpush.msra.mxu0 %v872
  %901 = vmatpush.msra.mxu0 %v869
  %902 = vmatpush.msra.mxu0 %v866
  %903 = vmatpush.msra.mxu0 %v863
  %904 = vmatpush.msra.mxu0 %v860
  %905 = vmatpush.msra.mxu0 %v857
  %906 = vmatpush.msra.mxu0 %v854
  %907 = vmatmul.f32.gmra.mxu0 %v889
  %v908 = vpop.f32.mrf.mxu0
  %v909 = vadd.f32 %v886, %v908
  %910 = vdwg.mxu0
  %911 = vmatpush.msra.mxu0 0.0
  %912 = vmatpush.msra.mxu0 0.0
  %913 = vmatpush.msra.mxu0 0.0
  %914 = vmatpush.msra.mxu0 0.0
  %915 = vmatpush.msra.mxu0 0.0
  %916 = vmatpush.msra.mxu0 0.0
  %917 = vmatpush.msra.mxu0 0.0
  %918 = vmatpush.msra.mxu0 %v879
  %919 = vmatpush.msra.mxu0 %v876
  %920 = vmatpush.msra.mxu0 %v873
  %921 = vmatpush.msra.mxu0 %v870
  %922 = vmatpush.msra.mxu0 %v867
  %923 = vmatpush.msra.mxu0 %v864
  %924 = vmatpush.msra.mxu0 %v861
  %925 = vmatpush.msra.mxu0 %v858
  %926 = vmatpush.msra.mxu0 %v855
  %927 = vmatmul.f32.gmra.mxu0 %v889
  %v928 = vpop.f32.mrf.mxu0
  %v929 = vadd.f32 %v886, %v928
  %930 = vdwg.mxu0
  %931 = vmatpush.msra.mxu0 0.0
  %932 = vmatpush.msra.mxu0 0.0
  %933 = vmatpush.msra.mxu0 0.0
  %934 = vmatpush.msra.mxu0 0.0
  %935 = vmatpush.msra.mxu0 0.0
  %936 = vmatpush.msra.mxu0 0.0
  %937 = vmatpush.msra.mxu0 0.0
  %938 = vmatpush.msra.mxu0 %v880
  %939 = vmatpush.msra.mxu0 %v877
  %940 = vmatpush.msra.mxu0 %v874
  %941 = vmatpush.msra.mxu0 %v871
  %942 = vmatpush.msra.mxu0 %v868
  %943 = vmatpush.msra.mxu0 %v865
  %944 = vmatpush.msra.mxu0 %v862
  %945 = vmatpush.msra.mxu0 %v859
  %946 = vmatpush.msra.mxu0 %v856
  %947 = vmatmul.f32.gmra.mxu0 %v889
  %v948 = vpop.f32.mrf.mxu0
  %v949 = vadd.f32 %v886, %v948
  %950 = vdwg.mxu0
  %s951 = scalar_lea.vmem %s3, 56
  %v952 = vld [vmem:[%s951] sm:$0xff]
  %s953 = scalar_lea.vmem %s3, 64
  %v954 = vld [vmem:[%s953] sm:$0xff]
  %v955 = vmax.f32 %v909, 0.0
  %v956 = vmax.f32 %v929, 0.0
  %v957 = vmax.f32 %v949, 0.0
  %v958 = vsel %vm366, %v955, 0.0
  %v959 = vsel %vm367, %v956, 0.0
  %v960 = vsel %vm368, %v957, 0.0
  %v961 = vadd.f32 %v958, %v959
  %v962 = vadd.f32 %v961, %v960
  %963 = vadd.xlane.f32.xlu0 %v962
  %v964 = vpop.xlane.xlu0 %963
  %v965 = vmul.f32 %v964, 0.003030303
  %v966 = vmul.f32 %v958, %v958
  %v967 = vmul.f32 %v959, %v959
  %v968 = vmul.f32 %v960, %v960
  %v969 = vadd.f32 %v966, %v967
  %v970 = vadd.f32 %v969, %v968
  %971 = vadd.xlane.f32.xlu0 %v970
  %v972 = vpop.xlane.xlu0 %971
  %v973 = vmul.f32 %v972, 0.003030303
  %v974 = vmul.f32 %v965, %v965
  %v975 = vsub.f32 %v973, %v974
  %v976 = vadd.f32 %v975, 1e-05
  %v977 = vrsqrt.pop %v976
  %v978 = vmul.f32 %v977, %v976
  %v979 = vmul.f32 %v978, %v977
  %v980 = vmul.f32 0.5, %v979
  %v981 = vsub.f32 1.5, %v980
  %v982 = vmul.f32 %v977, %v981
  %vm983 = vweird.f32 %v976
  %vm984 = vweird.f32 %v977
  %vm985 = vmor %vm983, %vm984
  %v986 = vsel %vm985, %v977, %v982
  %v987 = vmul.f32 %v952, %v986
  %989 = vset.pattern.permute.xlu0 0
  %990 = vperm.xlu0 %989, %v987
  %v991 = vpop.permute.xlu0 %990
  %v993 = vmul.f32 %v991, %v958
  %v994 = vmul.f32 %v991, %v959
  %v995 = vmul.f32 %v991, %v960
  %v996 = vmul.f32 %v987, %v965
  %v997 = vsub.f32 %v954, %v996
  %999 = vset.pattern.permute.xlu0 0
  %1000 = vperm.xlu0 %999, %v997
  %v1001 = vpop.permute.xlu0 %1000
  %v1003 = vadd.f32 %v993, %v1001
  %v1004 = vadd.f32 %v994, %v1001
  %v1005 = vadd.f32 %v995, %v1001
  %v1006 = vsel %vm366, %v1003, 0.0
  %v1007 = vsel %vm367, %v1004, 0.0
  %v1008 = vsel %vm368, %v1005, 0.0
  %1009 = vrot.lane.b32.xlu0 %v1006, 127
  %v1010 = vpop.permute.xlu0 %1009
  %1011 = vrot.lane.b32.xlu0 %v1007, 127
  %v1012 = vpop.permute.xlu0 %1011
  %1013 = vrot.lane.b32.xlu0 %v1008, 127
  %v1014 = vpop.permute.xlu0 %1013
  %v1015 = vsel %vm57, %v1012, %v1014
  %v1016 = vsel %vm57, %v1010, %v1012
  %v1017 = vsel %vm57, %v1014, %v1010
  %1018 = vrot.lane.b32.xlu0 %v1006, 1
  %v1019 = vpop.permute.xlu0 %1018
  %1020 = vrot.lane.b32.xlu0 %v1007, 1
  %v1021 = vpop.permute.xlu0 %1020
  %1022 = vrot.lane.b32.xlu0 %v1008, 1
  %v1023 = vpop.permute.xlu0 %1022
  %v1024 = vsel %vm67, %v1021, %v1023
  %v1025 = vsel %vm67, %v1019, %v1021
  %v1026 = vsel %vm67, %v1023, %v1019
  %v1027 = vsel %vm442, %v1026, 0.0
  %v1028 = vsel %vm443, %v1025, 0.0
  %v1029 = vsel %vm444, %v1024, 0.0
  %v1030 = vsel %vm452, %v1016, 0.0
  %v1031 = vsel %vm453, %v1015, 0.0
  %v1032 = vsel %vm454, %v1017, 0.0
  %1033 = vrot.lane.b32.xlu0 %v1027, 15
  %v1034 = vpop.permute.xlu0 %1033
  %1035 = vrot.lane.b32.xlu0 %v1028, 15
  %v1036 = vpop.permute.xlu0 %1035
  %1037 = vrot.lane.b32.xlu0 %v1029, 15
  %v1038 = vpop.permute.xlu0 %1037
  %v1039 = vsel %vm104, %v1036, %v1038
  %v1040 = vsel %vm104, %v1034, %v1036
  %v1041 = vsel %vm104, %v1038, %v1034
  %1042 = vrot.lane.b32.xlu0 %v1027, 113
  %v1043 = vpop.permute.xlu0 %1042
  %1044 = vrot.lane.b32.xlu0 %v1028, 113
  %v1045 = vpop.permute.xlu0 %1044
  %1046 = vrot.lane.b32.xlu0 %v1029, 113
  %v1047 = vpop.permute.xlu0 %1046
  %v1048 = vsel %vm114, %v1045, %v1047
  %v1049 = vsel %vm114, %v1043, %v1045
  %v1050 = vsel %vm114, %v1047, %v1043
  %v1051 = vsel %vm480, %v1041, 0.0
  %v1052 = vsel %vm481, %v1040, 0.0
  %v1053 = vsel %vm482, %v1039, 0.0
  %v1054 = vsel %vm490, %v1049, 0.0
  %v1055 = vsel %vm491, %v1048, 0.0
  %v1056 = vsel %vm492, %v1050, 0.0
  %1057 = vst [vmem:[#allocation2] sm:$0xff] %v1051
  %1058 = vst [vmem:[#allocation2 + $0x8] sm:$0xff] %v1052
  %1059 = vst [vmem:[#allocation2 + $0x10] sm:$0xff] %v1053
  %1060 = vst [vmem:[#allocation2 + $0x48] sm:$0xff] %v1027
  %1061 = vst [vmem:[#allocation2 + $0x50] sm:$0xff] %v1028
  %1062 = vst [vmem:[#allocation2 + $0x58] sm:$0xff] %v1029
  %1063 = vst [vmem:[#allocation2 + $0x90] sm:$0xff] %v1054
  %1064 = vst [vmem:[#allocation2 + $0x98] sm:$0xff] %v1055
  %1065 = vst [vmem:[#allocation2 + $0xa0] sm:$0xff] %v1056
  %1066 = vrot.lane.b32.xlu0 %v1006, 15
  %v1067 = vpop.permute.xlu0 %1066
  %1068 = vrot.lane.b32.xlu0 %v1007, 15
  %v1069 = vpop.permute.xlu0 %1068
  %1070 = vrot.lane.b32.xlu0 %v1008, 15
  %v1071 = vpop.permute.xlu0 %1070
  %v1072 = vsel %vm104, %v1069, %v1071
  %v1073 = vsel %vm104, %v1067, %v1069
  %v1074 = vsel %vm104, %v1071, %v1067
  %1075 = vrot.lane.b32.xlu0 %v1006, 113
  %v1076 = vpop.permute.xlu0 %1075
  %1077 = vrot.lane.b32.xlu0 %v1007, 113
  %v1078 = vpop.permute.xlu0 %1077
  %1079 = vrot.lane.b32.xlu0 %v1008, 113
  %v1080 = vpop.permute.xlu0 %1079
  %v1081 = vsel %vm114, %v1078, %v1080
  %v1082 = vsel %vm114, %v1076, %v1078
  %v1083 = vsel %vm114, %v1080, %v1076
  %v1084 = vsel %vm480, %v1074, 0.0
  %v1085 = vsel %vm481, %v1073, 0.0
  %v1086 = vsel %vm482, %v1072, 0.0
  %v1087 = vsel %vm490, %v1082, 0.0
  %v1088 = vsel %vm491, %v1081, 0.0
  %v1089 = vsel %vm492, %v1083, 0.0
  %1090 = vst [vmem:[#allocation2 + $0x18] sm:$0xff] %v1084
  %1091 = vst [vmem:[#allocation2 + $0x20] sm:$0xff] %v1085
  %1092 = vst [vmem:[#allocation2 + $0x28] sm:$0xff] %v1086
  %1093 = vst [vmem:[#allocation2 + $0x60] sm:$0xff] %v1006
  %1094 = vst [vmem:[#allocation2 + $0x68] sm:$0xff] %v1007
  %1095 = vst [vmem:[#allocation2 + $0x70] sm:$0xff] %v1008
  %1096 = vst [vmem:[#allocation2 + $0xa8] sm:$0xff] %v1087
  %1097 = vst [vmem:[#allocation2 + $0xb0] sm:$0xff] %v1088
  %1098 = vst [vmem:[#allocation2 + $0xb8] sm:$0xff] %v1089
  %1099 = vrot.lane.b32.xlu0 %v1030, 15
  %v1100 = vpop.permute.xlu0 %1099
  %1101 = vrot.lane.b32.xlu0 %v1031, 15
  %v1102 = vpop.permute.xlu0 %1101
  %1103 = vrot.lane.b32.xlu0 %v1032, 15
  %v1104 = vpop.permute.xlu0 %1103
  %v1105 = vsel %vm104, %v1102, %v1104
  %v1106 = vsel %vm104, %v1100, %v1102
  %v1107 = vsel %vm104, %v1104, %v1100
  %1108 = vrot.lane.b32.xlu0 %v1030, 113
  %v1109 = vpop.permute.xlu0 %1108
  %1110 = vrot.lane.b32.xlu0 %v1031, 113
  %v1111 = vpop.permute.xlu0 %1110
  %1112 = vrot.lane.b32.xlu0 %v1032, 113
  %v1113 = vpop.permute.xlu0 %1112
  %v1114 = vsel %vm114, %v1111, %v1113
  %v1115 = vsel %vm114, %v1109, %v1111
  %v1116 = vsel %vm114, %v1113, %v1109
  %v1117 = vsel %vm480, %v1107, 0.0
  %v1118 = vsel %vm481, %v1106, 0.0
  %v1119 = vsel %vm482, %v1105, 0.0
  %v1120 = vsel %vm490, %v1115, 0.0
  %v1121 = vsel %vm491, %v1114, 0.0
  %v1122 = vsel %vm492, %v1116, 0.0
  %1123 = vst [vmem:[#allocation2 + $0x30] sm:$0xff] %v1117
  %1124 = vst [vmem:[#allocation2 + $0x38] sm:$0xff] %v1118
  %1125 = vst [vmem:[#allocation2 + $0x40] sm:$0xff] %v1119
  %1126 = vst [vmem:[#allocation2 + $0x78] sm:$0xff] %v1030
  %1127 = vst [vmem:[#allocation2 + $0x80] sm:$0xff] %v1031
  %1128 = vst [vmem:[#allocation2 + $0x88] sm:$0xff] %v1032
  %1129 = vst [vmem:[#allocation2 + $0xc0] sm:$0xff] %v1120
  %1130 = vst [vmem:[#allocation2 + $0xc8] sm:$0xff] %v1121
  %1131 = vst [vmem:[#allocation2 + $0xd0] sm:$0xff] %v1122
  %s1132 = scalar_lea.vmem %s2, 24
  %v1133 = vld [vmem:[%s1132] sm:$0xff]
  %v1134 = vld [vmem:[#allocation2] sm:$0xff]
  %v1135 = vld [vmem:[#allocation2 + $0x8] sm:$0xff]
  %v1136 = vld [vmem:[#allocation2 + $0x10] sm:$0xff]
  %v1137 = vld [vmem:[#allocation2 + $0x18] sm:$0xff]
  %v1138 = vld [vmem:[#allocation2 + $0x20] sm:$0xff]
  %v1139 = vld [vmem:[#allocation2 + $0x28] sm:$0xff]
  %v1140 = vld [vmem:[#allocation2 + $0x30] sm:$0xff]
  %v1141 = vld [vmem:[#allocation2 + $0x38] sm:$0xff]
  %v1142 = vld [vmem:[#allocation2 + $0x40] sm:$0xff]
  %v1143 = vld [vmem:[#allocation2 + $0x48] sm:$0xff]
  %v1144 = vld [vmem:[#allocation2 + $0x50] sm:$0xff]
  %v1145 = vld [vmem:[#allocation2 + $0x58] sm:$0xff]
  %v1146 = vld [vmem:[#allocation2 + $0x60] sm:$0xff]
  %v1147 = vld [vmem:[#allocation2 + $0x68] sm:$0xff]
  %v1148 = vld [vmem:[#allocation2 + $0x70] sm:$0xff]
  %v1149 = vld [vmem:[#allocation2 + $0x78] sm:$0xff]
  %v1150 = vld [vmem:[#allocation2 + $0x80] sm:$0xff]
  %v1151 = vld [vmem:[#allocation2 + $0x88] sm:$0xff]
  %v1152 = vld [vmem:[#allocation2 + $0x90] sm:$0xff]
  %v1153 = vld [vmem:[#allocation2 + $0x98] sm:$0xff]
  %v1154 = vld [vmem:[#allocation2 + $0xa0] sm:$0xff]
  %v1155 = vld [vmem:[#allocation2 + $0xa8] sm:$0xff]
  %v1156 = vld [vmem:[#allocation2 + $0xb0] sm:$0xff]
  %v1157 = vld [vmem:[#allocation2 + $0xb8] sm:$0xff]
  %v1158 = vld [vmem:[#allocation2 + $0xc0] sm:$0xff]
  %v1159 = vld [vmem:[#allocation2 + $0xc8] sm:$0xff]
  %v1160 = vld [vmem:[#allocation2 + $0xd0] sm:$0xff]
  %s1161 = scalar_lea.vmem %s3, 72
  %v1162 = vld [vmem:[%s1161] sm:$0xff]
  %1164 = vset.pattern.permute.xlu0 0
  %1165 = vperm.xlu0 %1164, %v1162
  %v1166 = vpop.permute.xlu0 %1165
  %v1169 = vsel %vm607, %v1133, 0
  %1171 = vmatpush.msra.mxu0 0.0
  %1172 = vmatpush.msra.mxu0 0.0
  %1173 = vmatpush.msra.mxu0 0.0
  %1174 = vmatpush.msra.mxu0 0.0
  %1175 = vmatpush.msra.mxu0 0.0
  %1176 = vmatpush.msra.mxu0 0.0
  %1177 = vmatpush.msra.mxu0 0.0
  %1178 = vmatpush.msra.mxu0 %v1158
  %1179 = vmatpush.msra.mxu0 %v1155
  %1180 = vmatpush.msra.mxu0 %v1152
  %1181 = vmatpush.msra.mxu0 %v1149
  %1182 = vmatpush.msra.mxu0 %v1146
  %1183 = vmatpush.msra.mxu0 %v1143
  %1184 = vmatpush.msra.mxu0 %v1140
  %1185 = vmatpush.msra.mxu0 %v1137
  %1186 = vmatpush.msra.mxu0 %v1134
  %1187 = vmatmul.f32.gmra.mxu0 %v1169
  %v1188 = vpop.f32.mrf.mxu0
  %v1189 = vadd.f32 %v1166, %v1188
  %1190 = vdwg.mxu0
  %1191 = vmatpush.msra.mxu0 0.0
  %1192 = vmatpush.msra.mxu0 0.0
  %1193 = vmatpush.msra.mxu0 0.0
  %1194 = vmatpush.msra.mxu0 0.0
  %1195 = vmatpush.msra.mxu0 0.0
  %1196 = vmatpush.msra.mxu0 0.0
  %1197 = vmatpush.msra.mxu0 0.0
  %1198 = vmatpush.msra.mxu0 %v1159
  %1199 = vmatpush.msra.mxu0 %v1156
  %1200 = vmatpush.msra.mxu0 %v1153
  %1201 = vmatpush.msra.mxu0 %v1150
  %1202 = vmatpush.msra.mxu0 %v1147
  %1203 = vmatpush.msra.mxu0 %v1144
  %1204 = vmatpush.msra.mxu0 %v1141
  %1205 = vmatpush.msra.mxu0 %v1138
  %1206 = vmatpush.msra.mxu0 %v1135
  %1207 = vmatmul.f32.gmra.mxu0 %v1169
  %v1208 = vpop.f32.mrf.mxu0
  %v1209 = vadd.f32 %v1166, %v1208
  %1210 = vdwg.mxu0
  %1211 = vmatpush.msra.mxu0 0.0
  %1212 = vmatpush.msra.mxu0 0.0
  %1213 = vmatpush.msra.mxu0 0.0
  %1214 = vmatpush.msra.mxu0 0.0
  %1215 = vmatpush.msra.mxu0 0.0
  %1216 = vmatpush.msra.mxu0 0.0
  %1217 = vmatpush.msra.mxu0 0.0
  %1218 = vmatpush.msra.mxu0 %v1160
  %1219 = vmatpush.msra.mxu0 %v1157
  %1220 = vmatpush.msra.mxu0 %v1154
  %1221 = vmatpush.msra.mxu0 %v1151
  %1222 = vmatpush.msra.mxu0 %v1148
  %1223 = vmatpush.msra.mxu0 %v1145
  %1224 = vmatpush.msra.mxu0 %v1142
  %1225 = vmatpush.msra.mxu0 %v1139
  %1226 = vmatpush.msra.mxu0 %v1136
  %1227 = vmatmul.f32.gmra.mxu0 %v1169
  %v1228 = vpop.f32.mrf.mxu0
  %v1229 = vadd.f32 %v1166, %v1228
  %1230 = vdwg.mxu0
  %s1231 = scalar_lea.vmem %s3, 80
  %v1232 = vld [vmem:[%s1231] sm:$0xff]
  %s1233 = scalar_lea.vmem %s3, 88
  %v1234 = vld [vmem:[%s1233] sm:$0xff]
  %v1235 = vmax.f32 %v1189, 0.0
  %v1236 = vmax.f32 %v1209, 0.0
  %v1237 = vmax.f32 %v1229, 0.0
  %v1238 = vsel %vm366, %v1235, 0.0
  %v1239 = vsel %vm367, %v1236, 0.0
  %v1240 = vsel %vm368, %v1237, 0.0
  %v1241 = vadd.f32 %v1238, %v1239
  %v1242 = vadd.f32 %v1241, %v1240
  %1243 = vadd.xlane.f32.xlu0 %v1242
  %v1244 = vpop.xlane.xlu0 %1243
  %v1245 = vmul.f32 %v1244, 0.003030303
  %v1246 = vmul.f32 %v1238, %v1238
  %v1247 = vmul.f32 %v1239, %v1239
  %v1248 = vmul.f32 %v1240, %v1240
  %v1249 = vadd.f32 %v1246, %v1247
  %v1250 = vadd.f32 %v1249, %v1248
  %1251 = vadd.xlane.f32.xlu0 %v1250
  %v1252 = vpop.xlane.xlu0 %1251
  %v1253 = vmul.f32 %v1252, 0.003030303
  %v1254 = vmul.f32 %v1245, %v1245
  %v1255 = vsub.f32 %v1253, %v1254
  %v1256 = vadd.f32 %v1255, 1e-05
  %v1257 = vrsqrt.pop %v1256
  %v1258 = vmul.f32 %v1257, %v1256
  %v1259 = vmul.f32 %v1258, %v1257
  %v1260 = vmul.f32 0.5, %v1259
  %v1261 = vsub.f32 1.5, %v1260
  %v1262 = vmul.f32 %v1257, %v1261
  %vm1263 = vweird.f32 %v1256
  %vm1264 = vweird.f32 %v1257
  %vm1265 = vmor %vm1263, %vm1264
  %v1266 = vsel %vm1265, %v1257, %v1262
  %v1267 = vmul.f32 %v1232, %v1266
  %1269 = vset.pattern.permute.xlu0 0
  %1270 = vperm.xlu0 %1269, %v1267
  %v1271 = vpop.permute.xlu0 %1270
  %v1273 = vmul.f32 %v1271, %v1238
  %v1274 = vmul.f32 %v1271, %v1239
  %v1275 = vmul.f32 %v1271, %v1240
  %v1276 = vmul.f32 %v1267, %v1245
  %v1277 = vsub.f32 %v1234, %v1276
  %1279 = vset.pattern.permute.xlu0 0
  %1280 = vperm.xlu0 %1279, %v1277
  %v1281 = vpop.permute.xlu0 %1280
  %v1283 = vadd.f32 %v1273, %v1281
  %v1284 = vadd.f32 %v1274, %v1281
  %v1285 = vadd.f32 %v1275, %v1281
  %v1286 = vsel %vm366, %v1283, 0.0
  %v1287 = vsel %vm367, %v1284, 0.0
  %v1288 = vsel %vm368, %v1285, 0.0
  %v1290 = vperm.slane %v21, 0
  %v1291 = vperm.slane %v21, 1
  %v1292 = vperm.slane %v21, 2
  %v1296 = vmul.f32 %v1286, %v1290
  %v1297 = vmul.f32 %v1287, %v1291
  %v1298 = vmul.f32 %v1288, %v1292
  %v1299 = vrot.slane %v1296, 4
  %v1300 = vadd.f32 %v1296, %v1299
  %v1301 = vrot.slane %v1300, 2
  %v1302 = vadd.f32 %v1300, %v1301
  %v1303 = vrot.slane %v1302, 1
  %v1304 = vadd.f32 %v1302, %v1303
  %v1305 = vrot.slane %v1297, 4
  %v1306 = vadd.f32 %v1297, %v1305
  %v1307 = vrot.slane %v1306, 2
  %v1308 = vadd.f32 %v1306, %v1307
  %v1309 = vrot.slane %v1308, 1
  %v1310 = vadd.f32 %v1308, %v1309
  %v1311 = vrot.slane %v1298, 4
  %v1312 = vadd.f32 %v1298, %v1311
  %v1313 = vrot.slane %v1312, 2
  %v1314 = vadd.f32 %v1312, %v1313
  %v1315 = vrot.slane %v1314, 1
  %v1316 = vadd.f32 %v1314, %v1315
  %vm1317 = vcmp.eq.f32.partialorder %v27, 0.0
  %v1318 = vrot.slane %v364, 7
  %v1319 = vrot.slane %v365, 6
  %v1320 = vsel %vm76, %v363, %v1318
  %v1321 = vsel %vm78, %v1320, %v1319
  %vm1322 = vcmp.ne.s32.totalorder %v1321, 0
  %vm1323 = vmand %vm1317, %vm1322
  %v1327 = vrot.slane %v1310, 7
  %v1328 = vrot.slane %v1316, 6
  %v1329 = vsel %vm76, %v1304, %v1327
  %v1330 = vsel %vm78, %v1329, %v1328
  %v1332 = vsel %vm1323, %v1330, 0.0
  %v1334 = vperm.slane %v1332, 0
  %v1335 = vperm.slane %v1332, 1
  %v1336 = vperm.slane %v1332, 2
  %v1340 = vsel %vm76, %v1334, 0.0
  %v1341 = vsel %vm76, %v1335, 0.0
  %v1342 = vadd.f32 %v1340, %v1341
  %v1343 = vsel %vm76, %v1336, 0.0
  %v1344 = vadd.f32 %v1342, %v1343
  %1345 = vadd.xlane.f32.xlu0 %v1344
  %v1346 = vpop.xlane.xlu0 %1345
  %vm1347 = vcmp.eq.f32.partialorder %v27, 1.0
  %vm1348 = vmand %vm1347, %vm1322
  %v1349 = vsel %vm1348, %v1330, 0.0
  %v1351 = vperm.slane %v1349, 0
  %v1352 = vperm.slane %v1349, 1
  %v1353 = vperm.slane %v1349, 2
  %v1357 = vsel %vm76, %v1351, 0.0
  %v1358 = vsel %vm76, %v1352, 0.0
  %v1359 = vadd.f32 %v1357, %v1358
  %v1360 = vsel %vm76, %v1353, 0.0
  %v1361 = vadd.f32 %v1359, %v1360
  %1362 = vadd.xlane.f32.xlu0 %v1361
  %v1363 = vpop.xlane.xlu0 %1362
  %v1365 = vrot.slane %v1363, 7
  %v1367 = vsel %vm76, %v1346, %v1365
  %v1368 = vmul.f32 %v1367, 0.011363637
  %s1369 = sld [smem:[#allocation3]]
  %v1370 = vstv %s1369
  %v1371 = vadd.f32 %v1368, %v1370
  %vm1372 = vcmask 1024
  %1373 = vst.msk [vmem:[%s5] sm:$0x3] %vm1372, %v1371
  // Predicated region
  $region22: #{_forward_impl.1} parent=0 // pred_check
    _
  $region23: #{_forward_impl.1} parent=0 // pred_check_branch
    %1375 = sbr.rel (0) target = $region25
  $region24: #{_forward_impl.1} parent=0 // pred_region
    _
  $region25: #{_forward_impl.1} parent=0 // pred_fallthru
    _
  // Predicated region
  $region26: #{_forward_impl.1} parent=0 // pred_check
    _
  $region27: #{_forward_impl.1} parent=0 // pred_check_branch
    %1377 = sbr.rel (0) target = $region29
  $region28: #{_forward_impl.1} parent=0 // pred_region
    _
  $region29: #{_forward_impl.1} parent=0 // pred_fallthru
    _

</llo_original>
